<compile_context>
chip_gen: v7x
topology: tpu7x:2x2x1
jax: 0.10.0
libtpu: 0.0.40
codegen_flags: <defaults>
</compile_context>

<pallas_src>
import jax
import jax.numpy as jnp
from jax.experimental import pallas as pl
from jax.experimental.pallas import tpu as pltpu

# ---- model dims (small, consistent with the module: d_model % heads == 0) ----
BATCH = 2
SEQ = 8
D_MODEL = 128
HEADS = 4
HEAD_DIM = D_MODEL // HEADS
H_DIM = 256
EPS = 1e-5
_INV_SQRT2 = 0.7071067811865476

# Row layout of the packed (16, D_MODEL) small-parameter array.
ROW_BQ, ROW_BK, ROW_BV, ROW_BO = 0, 1, 2, 3
ROW_LN1_G, ROW_LN1_B = 4, 5
ROW_LN2_G, ROW_LN2_B = 6, 7
ROW_LNM_G, ROW_LNM_B = 8, 9
ROW_B2 = 10
N_VEC_ROWS = 16  # padded to a multiple of 8 sublanes


def _layernorm(x, g, b):
    # x: (R, D), g/b: (1, D); f32 math
    mu = jnp.mean(x, axis=-1, keepdims=True)
    var = jnp.mean((x - mu) ** 2, axis=-1, keepdims=True)
    return (x - mu) * jax.lax.rsqrt(var + EPS) * g + b


def _make_kernel(b_tile, seq):
    """Kernel processing b_tile*seq rows per grid step."""

    def kernel(x_ref, wqkv_ref, wo_ref, w1_ref, w2_ref, b1_ref, vec_ref, o_ref):
        x = x_ref[...].astype(jnp.float32)            # (b_tile*seq, D)
        vec = vec_ref[...]                            # (16, D) f32, packed params

        def row(i):                                   # (1, D) view of packed params
            return vec[i:i + 1, :]

        # ---------------- attention branch:  x + Attn(norm1(x)) ----------------
        xn = _layernorm(x, row(ROW_LN1_G), row(ROW_LN1_B))

        # Fused QKV projection: one MXU push with N = 3*D.
        qkv = jnp.dot(xn.astype(jnp.bfloat16), wqkv_ref[...],
                      preferred_element_type=jnp.float32)        # (rows, 3D)
        scale = 1.0 / (HEAD_DIM ** 0.5)
        # Lane slices at 0/128/256 are 128-aligned -> free views.
        q = (qkv[:, 0:D_MODEL] + row(ROW_BQ)) * scale
        k = qkv[:, D_MODEL:2 * D_MODEL] + row(ROW_BK)
        v = qkv[:, 2 * D_MODEL:3 * D_MODEL] + row(ROW_BV)

        wo = wo_ref[...]                                         # (D, D) bf16

        attn_rows = []
        for b in range(b_tile):                                  # static loop over samples
            r0 = b * seq
            q_b = q[r0:r0 + seq, :]                              # (S, D) f32
            k_bT = k[r0:r0 + seq, :].T                           # (D, S): ONE transpose/sample
            v_b = v[r0:r0 + seq, :].astype(jnp.bfloat16)         # (S, D) bf16
            acc_b = jnp.zeros((seq, D_MODEL), jnp.float32)       # projected output accumulator
            for h in range(HEADS):                               # static loop over heads
                lo = h * HEAD_DIM
                qh = q_b[:, lo:lo + HEAD_DIM].astype(jnp.bfloat16)      # (S, hd)
                khT = k_bT[lo:lo + HEAD_DIM, :].astype(jnp.bfloat16)    # (hd, S) sublane slice
                s = jnp.dot(qh, khT, preferred_element_type=jnp.float32)  # (S, S) f32
                s = s - jnp.max(s, axis=-1, keepdims=True)
                p = jnp.exp(s)                                           # unnormalized probs
                o_h = jnp.dot(p.astype(jnp.bfloat16), v_b[:, lo:lo + HEAD_DIM],
                              preferred_element_type=jnp.float32)        # (S, hd)
                # normalize AFTER p@v; EUP approx reciprocal is effectively free
                o_h = o_h * pl.reciprocal(jnp.sum(p, axis=-1, keepdims=True),
                                          approx=True)
                # accumulate straight into the output projection
                # (wo row-slice at 32-row offsets is sublane-aligned -> free)
                acc_b = acc_b + jnp.dot(o_h.astype(jnp.bfloat16),
                                        wo[lo:lo + HEAD_DIM, :],
                                        preferred_element_type=jnp.float32)
            attn_rows.append(acc_b)
        attn = (jnp.concatenate(attn_rows, axis=0) if b_tile > 1 else attn_rows[0])
        attn = attn + row(ROW_BO)
        # TODO(synk): dropout inside MultiheadAttention / MLP treated as identity (eval mode).

        x1 = x + attn

        # ---------------- MLP branch:  x1 + MLP(norm2(x1)) ----------------
        # NOTE: the PyTorch MLP has its own LayerNorm, so there are two LNs in a row.
        xn2 = _layernorm(x1, row(ROW_LN2_G), row(ROW_LN2_B))
        xn2 = _layernorm(xn2, row(ROW_LNM_G), row(ROW_LNM_B))
        h1 = jnp.dot(xn2.astype(jnp.bfloat16), w1_ref[...],
                     preferred_element_type=jnp.float32) + b1_ref[...]   # (rows, H)
        # exact (erf) GELU, matching torch.nn.GELU() default; f32 on the EUP/VPU
        h1 = 0.5 * h1 * (1.0 + jax.lax.erf(h1 * _INV_SQRT2))
        y = jnp.dot(h1.astype(jnp.bfloat16), w2_ref[...],
                    preferred_element_type=jnp.float32) + row(ROW_B2)

        o_ref[...] = (x1 + y).astype(o_ref.dtype)

    return kernel


def encoder_block(x, params, *, b_tile=None):
    """x: (B, S, D) f32. params: (wqkv_bf16, wo_bf16, w1_bf16, w2_bf16, b1_f32, vec_f32)."""
    wqkv, wo, w1, w2, b1, vec = params
    B, S, D = x.shape
    assert S == SEQ and D == D_MODEL

    if b_tile is None:
        # Fold the whole batch into the matmul M dimension -> grid=(1,).
        # NOTE(v7x): with larger batches pick b_tile = B // 2 so both
        # TensorCores get a "parallel" grid step.
        b_tile = B
    assert B % b_tile == 0
    rows = b_tile * S

    x2d = x.reshape(B * S, D)

    out2d = pl.pallas_call(
        _make_kernel(b_tile, S),
        out_shape=jax.ShapeDtypeStruct((B * S, D), x.dtype),
        grid_spec=pltpu.PrefetchScalarGridSpec(
            num_scalar_prefetch=0,
            grid=(B // b_tile,),
            in_specs=[
                pl.BlockSpec((rows, D), lambda i: (i, 0)),          # x rows
                pl.BlockSpec((D, 3 * D), lambda i: (0, 0)),         # fused wqkv (bf16)
                pl.BlockSpec((D, D), lambda i: (0, 0)),             # wo (bf16)
                pl.BlockSpec((D, H_DIM), lambda i: (0, 0)),         # w1 (bf16)
                pl.BlockSpec((H_DIM, D), lambda i: (0, 0)),         # w2 (bf16)
                pl.BlockSpec((1, H_DIM), lambda i: (0, 0)),         # b1 (f32)
                pl.BlockSpec((N_VEC_ROWS, D), lambda i: (0, 0)),    # packed small params (f32)
            ],
            out_specs=pl.BlockSpec((rows, D), lambda i: (i, 0)),
        ),
        compiler_params=pltpu.CompilerParams(
            # VMEM footprint here is ~1 MiB; no explicit vmem_limit_bytes needed.
            # Re-derive tile sizes (and set vmem_limit_bytes) if scaled to real ViT dims.
            dimension_semantics=("parallel",)),
    )(x2d, wqkv, wo, w1, w2, b1, vec)

    return out2d.reshape(B, S, D)


# ---------------- parameter construction / packing ----------------
def make_raw_params(key):
    ks = jax.random.split(key, 8)
    sc = 0.02
    wq = sc * jax.random.normal(ks[0], (D_MODEL, D_MODEL), jnp.float32)
    wk = sc * jax.random.normal(ks[1], (D_MODEL, D_MODEL), jnp.float32)
    wv = sc * jax.random.normal(ks[2], (D_MODEL, D_MODEL), jnp.float32)
    bq = sc * jax.random.normal(ks[3], (1, D_MODEL), jnp.float32)
    bk = jnp.zeros((1, D_MODEL), jnp.float32)
    bv = sc * jax.random.normal(ks[4], (1, D_MODEL), jnp.float32)
    wo = sc * jax.random.normal(ks[5], (D_MODEL, D_MODEL), jnp.float32)
    bo = jnp.zeros((1, D_MODEL), jnp.float32)
    ln1_g = jnp.ones((1, D_MODEL), jnp.float32)
    ln1_b = jnp.zeros((1, D_MODEL), jnp.float32)
    ln2_g = jnp.ones((1, D_MODEL), jnp.float32)
    ln2_b = jnp.zeros((1, D_MODEL), jnp.float32)
    lnm_g = jnp.ones((1, D_MODEL), jnp.float32)
    lnm_b = jnp.zeros((1, D_MODEL), jnp.float32)
    w1 = sc * jax.random.normal(ks[6], (D_MODEL, H_DIM), jnp.float32)
    b1 = jnp.zeros((1, H_DIM), jnp.float32)
    w2 = sc * jax.random.normal(ks[7], (H_DIM, D_MODEL), jnp.float32)
    b2 = jnp.zeros((1, D_MODEL), jnp.float32)
    return (wq, wk, wv, bq, bk, bv, wo, bo,
            ln1_g, ln1_b, ln2_g, ln2_b, lnm_g, lnm_b,
            w1, b1, w2, b2)


def pack_params(raw):
    (wq, wk, wv, bq, bk, bv, wo, bo,
     ln1_g, ln1_b, ln2_g, ln2_b, lnm_g, lnm_b,
     w1, b1, w2, b2) = raw
    # Fused QKV weight; matmul operands stored in bf16 (f32 accumulation in-kernel).
    wqkv = jnp.concatenate([wq, wk, wv], axis=1).astype(jnp.bfloat16)   # (D, 3D)
    vec = jnp.zeros((N_VEC_ROWS, D_MODEL), jnp.float32)
    vec = vec.at[ROW_BQ].set(bq[0]).at[ROW_BK].set(bk[0]).at[ROW_BV].set(bv[0])
    vec = vec.at[ROW_BO].set(bo[0]).at[ROW_B2].set(b2[0])
    vec = vec.at[ROW_LN1_G].set(ln1_g[0]).at[ROW_LN1_B].set(ln1_b[0])
    vec = vec.at[ROW_LN2_G].set(ln2_g[0]).at[ROW_LN2_B].set(ln2_b[0])
    vec = vec.at[ROW_LNM_G].set(lnm_g[0]).at[ROW_LNM_B].set(lnm_b[0])
    return (wqkv,
            wo.astype(jnp.bfloat16),
            w1.astype(jnp.bfloat16),
            w2.astype(jnp.bfloat16),
            b1,
            vec)


# ---------------- pure-JAX f32 reference (same math, full precision) ----------------
def _ref_layernorm(x, g, b):
    mu = jnp.mean(x, axis=-1, keepdims=True)
    var = jnp.mean((x - mu) ** 2, axis=-1, keepdims=True)
    return (x - mu) * jax.lax.rsqrt(var + EPS) * g + b


def encoder_block_ref(x, raw):
    (wq, wk, wv, bq, bk, bv, wo, bo,
     ln1_g, ln1_b, ln2_g, ln2_b, lnm_g, lnm_b,
     w1, b1, w2, b2) = raw
    x = x.astype(jnp.float32)
    xn = _ref_layernorm(x, ln1_g, ln1_b)
    q = xn @ wq + bq
    k = xn @ wk + bk
    v = xn @ wv + bv
    B, S, D = x.shape
    q = q.reshape(B, S, HEADS, HEAD_DIM).transpose(0, 2, 1, 3)
    k = k.reshape(B, S, HEADS, HEAD_DIM).transpose(0, 2, 1, 3)
    v = v.reshape(B, S, HEADS, HEAD_DIM).transpose(0, 2, 1, 3)
    s = jnp.einsum("bhqd,bhkd->bhqk", q, k) / (HEAD_DIM ** 0.5)
    p = jax.nn.softmax(s, axis=-1)
    o = jnp.einsum("bhqk,bhkd->bhqd", p, v).transpose(0, 2, 1, 3).reshape(B, S, D)
    attn = o @ wo + bo
    x1 = x + attn
    xn2 = _ref_layernorm(_ref_layernorm(x1, ln2_g, ln2_b), lnm_g, lnm_b)
    h1 = xn2 @ w1 + b1
    h1 = 0.5 * h1 * (1.0 + jax.lax.erf(h1 * _INV_SQRT2))
    return x1 + (h1 @ w2 + b2)


if __name__ == "__main__":
    key = jax.random.PRNGKey(0)
    kx, kp = jax.random.split(key)
    x = jax.random.normal(kx, (BATCH, SEQ, D_MODEL), jnp.float32)
    raw = make_raw_params(kp)
    params = pack_params(raw)

    out = jax.block_until_ready(encoder_block(x, params))
    ref = encoder_block_ref(x, raw)

    assert out.shape == (BATCH, SEQ, D_MODEL)
    assert bool(jnp.all(jnp.isfinite(out)))
    err = float(jnp.max(jnp.abs(out - ref)))
    # bf16 MXU operands in the kernel vs a full-f32 reference -> loosened tolerance.
    assert err < 2e-2, f"mismatch vs reference: max abs err = {err}"
    print("KERNEL_OK")
</pallas_src>

<mosaic_0001>
module attributes {stable_mosaic.version = 11 : i64} {
  func.func @kernel(%arg0: i32, %arg1: memref<16x128xf32, #tpu.memory_space<vmem>>, %arg2: memref<128x384xbf16, #tpu.memory_space<vmem>>, %arg3: memref<128x128xbf16, #tpu.memory_space<vmem>>, %arg4: memref<128x256xbf16, #tpu.memory_space<vmem>>, %arg5: memref<256x128xbf16, #tpu.memory_space<vmem>>, %arg6: memref<1x256xf32, #tpu.memory_space<vmem>>, %arg7: memref<16x128xf32, #tpu.memory_space<vmem>>, %arg8: memref<16x128xf32, #tpu.memory_space<vmem>>) attributes {dimension_semantics = [#tpu.dimension_semantics<parallel>], iteration_bounds = array<i64: 1>, scalar_prefetch = 0 : i64, scratch_operands = 0 : i64, tpu.core_type = #tpu.core_type<tc>, window_params = [{transform_indices = @transform_0, window_bounds = array<i64: 16, 128>}, {pipeline_mode = #tpu.pipeline_mode<synchronous>, transform_indices = @transform_1, window_bounds = array<i64: 128, 384>}, {pipeline_mode = #tpu.pipeline_mode<synchronous>, transform_indices = @transform_2, window_bounds = array<i64: 128, 128>}, {pipeline_mode = #tpu.pipeline_mode<synchronous>, transform_indices = @transform_3, window_bounds = array<i64: 128, 256>}, {pipeline_mode = #tpu.pipeline_mode<synchronous>, transform_indices = @transform_4, window_bounds = array<i64: 256, 128>}, {pipeline_mode = #tpu.pipeline_mode<synchronous>, transform_indices = @transform_5, window_bounds = array<i64: 1, 256>}, {pipeline_mode = #tpu.pipeline_mode<synchronous>, transform_indices = @transform_6, window_bounds = array<i64: 16, 128>}, {transform_indices = @transform_7, window_bounds = array<i64: 16, 128>}]} {
    %c0 = arith.constant 0 : index
    %c0_0 = arith.constant 0 : index
    %0 = vector.load %arg1[%c0, %c0_0] : memref<16x128xf32, #tpu.memory_space<vmem>>, vector<16x128xf32>
    %c0_1 = arith.constant 0 : index
    %c0_2 = arith.constant 0 : index
    %1 = vector.load %arg7[%c0_1, %c0_2] : memref<16x128xf32, #tpu.memory_space<vmem>>, vector<16x128xf32>
    %2 = vector.extract_strided_slice %1 {offsets = [4, 0], sizes = [1, 128], strides = [1, 1]} : vector<16x128xf32> to vector<1x128xf32>
    %3 = vector.extract_strided_slice %1 {offsets = [5, 0], sizes = [1, 128], strides = [1, 1]} : vector<16x128xf32> to vector<1x128xf32>
    %cst = arith.constant dense<0.000000e+00> : vector<16xf32>
    %4 = vector.multi_reduction <add>, %0, %cst [1] : vector<16x128xf32> to vector<16xf32>
    %5 = vector.shape_cast %4 : vector<16xf32> to vector<16x1xf32>
    %cst_3 = arith.constant 1.280000e+02 : f32
    %6 = vector.broadcast %cst_3 : f32 to vector<16x1xf32>
    %7 = arith.divf %5, %6 : vector<16x1xf32>
    %8 = vector.broadcast %7 : vector<16x1xf32> to vector<16x128xf32>
    %9 = arith.subf %0, %8 : vector<16x128xf32>
    %10 = arith.mulf %9, %9 : vector<16x128xf32>
    %cst_4 = arith.constant dense<0.000000e+00> : vector<16xf32>
    %11 = vector.multi_reduction <add>, %10, %cst_4 [1] : vector<16x128xf32> to vector<16xf32>
    %12 = vector.shape_cast %11 : vector<16xf32> to vector<16x1xf32>
    %cst_5 = arith.constant 1.280000e+02 : f32
    %13 = vector.broadcast %cst_5 : f32 to vector<16x1xf32>
    %14 = arith.divf %12, %13 : vector<16x1xf32>
    %15 = vector.broadcast %7 : vector<16x1xf32> to vector<16x128xf32>
    %16 = arith.subf %0, %15 : vector<16x128xf32>
    %cst_6 = arith.constant 9.99999974E-6 : f32
    %17 = vector.broadcast %cst_6 : f32 to vector<16x1xf32>
    %18 = arith.addf %14, %17 : vector<16x1xf32>
    %19 = math.rsqrt %18 : vector<16x1xf32>
    %20 = vector.broadcast %19 : vector<16x1xf32> to vector<16x128xf32>
    %21 = arith.mulf %16, %20 : vector<16x128xf32>
    %22 = vector.broadcast %2 : vector<1x128xf32> to vector<16x128xf32>
    %23 = arith.mulf %21, %22 : vector<16x128xf32>
    %24 = vector.broadcast %3 : vector<1x128xf32> to vector<16x128xf32>
    %25 = arith.addf %23, %24 : vector<16x128xf32>
    %26 = arith.truncf %25 : vector<16x128xf32> to vector<16x128xbf16>
    %c0_7 = arith.constant 0 : index
    %c0_8 = arith.constant 0 : index
    %27 = vector.load %arg2[%c0_7, %c0_8] : memref<128x384xbf16, #tpu.memory_space<vmem>>, vector<128x384xbf16>
    %cst_9 = arith.constant dense<0.000000e+00> : vector<16x384xf32>
    %28 = tpu.matmul %26, %27, %cst_9 {dimension_numbers = #tpu.dot_dimension_numbers<[1], [0], [0], [1], [0, 0, 1, 1], [], []>} : vector<16x128xbf16>, vector<128x384xbf16>, vector<16x384xf32> -> vector<16x384xf32>
    %29 = vector.extract_strided_slice %28 {offsets = [0, 0], sizes = [16, 128], strides = [1, 1]} : vector<16x384xf32> to vector<16x128xf32>
    %30 = vector.extract_strided_slice %1 {offsets = [0, 0], sizes = [1, 128], strides = [1, 1]} : vector<16x128xf32> to vector<1x128xf32>
    %31 = vector.broadcast %30 : vector<1x128xf32> to vector<16x128xf32>
    %32 = arith.addf %29, %31 : vector<16x128xf32>
    %cst_10 = arith.constant 0.176776692 : f32
    %33 = vector.broadcast %cst_10 : f32 to vector<16x128xf32>
    %34 = arith.mulf %32, %33 : vector<16x128xf32>
    %35 = vector.extract_strided_slice %28 {offsets = [0, 128], sizes = [16, 128], strides = [1, 1]} : vector<16x384xf32> to vector<16x128xf32>
    %36 = vector.extract_strided_slice %1 {offsets = [1, 0], sizes = [1, 128], strides = [1, 1]} : vector<16x128xf32> to vector<1x128xf32>
    %37 = vector.broadcast %36 : vector<1x128xf32> to vector<16x128xf32>
    %38 = arith.addf %35, %37 : vector<16x128xf32>
    %39 = vector.extract_strided_slice %28 {offsets = [0, 256], sizes = [16, 128], strides = [1, 1]} : vector<16x384xf32> to vector<16x128xf32>
    %40 = vector.extract_strided_slice %1 {offsets = [2, 0], sizes = [1, 128], strides = [1, 1]} : vector<16x128xf32> to vector<1x128xf32>
    %41 = vector.broadcast %40 : vector<1x128xf32> to vector<16x128xf32>
    %42 = arith.addf %39, %41 : vector<16x128xf32>
    %c0_11 = arith.constant 0 : index
    %c0_12 = arith.constant 0 : index
    %43 = vector.load %arg3[%c0_11, %c0_12] : memref<128x128xbf16, #tpu.memory_space<vmem>>, vector<128x128xbf16>
    %44 = vector.extract_strided_slice %34 {offsets = [0, 0], sizes = [8, 128], strides = [1, 1]} : vector<16x128xf32> to vector<8x128xf32>
    %45 = vector.extract_strided_slice %38 {offsets = [0, 0], sizes = [8, 128], strides = [1, 1]} : vector<16x128xf32> to vector<8x128xf32>
    %46 = tpu.transpose %45, [1, 0] : vector<8x128xf32> -> vector<128x8xf32>
    %47 = vector.extract_strided_slice %42 {offsets = [0, 0], sizes = [8, 128], strides = [1, 1]} : vector<16x128xf32> to vector<8x128xf32>
    %48 = arith.truncf %47 : vector<8x128xf32> to vector<8x128xbf16>
    %cst_13 = arith.constant 0.000000e+00 : f32
    %49 = vector.broadcast %cst_13 : f32 to vector<8x128xf32>
    %50 = vector.extract_strided_slice %44 {offsets = [0, 0], sizes = [8, 32], strides = [1, 1]} : vector<8x128xf32> to vector<8x32xf32>
    %51 = arith.truncf %50 : vector<8x32xf32> to vector<8x32xbf16>
    %52 = vector.extract_strided_slice %46 {offsets = [0, 0], sizes = [32, 8], strides = [1, 1]} : vector<128x8xf32> to vector<32x8xf32>
    %53 = arith.truncf %52 : vector<32x8xf32> to vector<32x8xbf16>
    %cst_14 = arith.constant dense<0.000000e+00> : vector<8x8xf32>
    %54 = tpu.matmul %51, %53, %cst_14 {dimension_numbers = #tpu.dot_dimension_numbers<[1], [0], [0], [1], [0, 0, 1, 1], [], []>} : vector<8x32xbf16>, vector<32x8xbf16>, vector<8x8xf32> -> vector<8x8xf32>
    %cst_15 = arith.constant dense<0xFF800000> : vector<8xf32>
    %55 = vector.multi_reduction <maximumf>, %54, %cst_15 [1] : vector<8x8xf32> to vector<8xf32>
    %56 = vector.shape_cast %55 : vector<8xf32> to vector<8x1xf32>
    %57 = vector.broadcast %56 : vector<8x1xf32> to vector<8x8xf32>
    %58 = arith.subf %54, %57 : vector<8x8xf32>
    %59 = math.exp %58 : vector<8x8xf32>
    %60 = arith.truncf %59 : vector<8x8xf32> to vector<8x8xbf16>
    %61 = vector.extract_strided_slice %48 {offsets = [0, 0], sizes = [8, 32], strides = [1, 1]} : vector<8x128xbf16> to vector<8x32xbf16>
    %cst_16 = arith.constant dense<0.000000e+00> : vector<8x32xf32>
    %62 = tpu.matmul %60, %61, %cst_16 {dimension_numbers = #tpu.dot_dimension_numbers<[1], [0], [0], [1], [0, 0, 1, 1], [], []>} : vector<8x8xbf16>, vector<8x32xbf16>, vector<8x32xf32> -> vector<8x32xf32>
    %cst_17 = arith.constant dense<0.000000e+00> : vector<8xf32>
    %63 = vector.multi_reduction <add>, %59, %cst_17 [1] : vector<8x8xf32> to vector<8xf32>
    %64 = vector.shape_cast %63 : vector<8xf32> to vector<8x1xf32>
    %65 = tpu.reciprocal %64 {approx = true} : vector<8x1xf32> -> vector<8x1xf32>
    %66 = vector.broadcast %65 : vector<8x1xf32> to vector<8x32xf32>
    %67 = arith.mulf %62, %66 : vector<8x32xf32>
    %68 = arith.truncf %67 : vector<8x32xf32> to vector<8x32xbf16>
    %69 = vector.extract_strided_slice %43 {offsets = [0, 0], sizes = [32, 128], strides = [1, 1]} : vector<128x128xbf16> to vector<32x128xbf16>
    %cst_18 = arith.constant dense<0.000000e+00> : vector<8x128xf32>
    %70 = tpu.matmul %68, %69, %cst_18 {dimension_numbers = #tpu.dot_dimension_numbers<[1], [0], [0], [1], [0, 0, 1, 1], [], []>} : vector<8x32xbf16>, vector<32x128xbf16>, vector<8x128xf32> -> vector<8x128xf32>
    %71 = arith.addf %49, %70 : vector<8x128xf32>
    %72 = vector.extract_strided_slice %44 {offsets = [0, 32], sizes = [8, 32], strides = [1, 1]} : vector<8x128xf32> to vector<8x32xf32>
    %73 = arith.truncf %72 : vector<8x32xf32> to vector<8x32xbf16>
    %74 = vector.extract_strided_slice %46 {offsets = [32, 0], sizes = [32, 8], strides = [1, 1]} : vector<128x8xf32> to vector<32x8xf32>
    %75 = arith.truncf %74 : vector<32x8xf32> to vector<32x8xbf16>
    %cst_19 = arith.constant dense<0.000000e+00> : vector<8x8xf32>
    %76 = tpu.matmul %73, %75, %cst_19 {dimension_numbers = #tpu.dot_dimension_numbers<[1], [0], [0], [1], [0, 0, 1, 1], [], []>} : vector<8x32xbf16>, vector<32x8xbf16>, vector<8x8xf32> -> vector<8x8xf32>
    %cst_20 = arith.constant dense<0xFF800000> : vector<8xf32>
    %77 = vector.multi_reduction <maximumf>, %76, %cst_20 [1] : vector<8x8xf32> to vector<8xf32>
    %78 = vector.shape_cast %77 : vector<8xf32> to vector<8x1xf32>
    %79 = vector.broadcast %78 : vector<8x1xf32> to vector<8x8xf32>
    %80 = arith.subf %76, %79 : vector<8x8xf32>
    %81 = math.exp %80 : vector<8x8xf32>
    %82 = arith.truncf %81 : vector<8x8xf32> to vector<8x8xbf16>
    %83 = vector.extract_strided_slice %48 {offsets = [0, 32], sizes = [8, 32], strides = [1, 1]} : vector<8x128xbf16> to vector<8x32xbf16>
    %cst_21 = arith.constant dense<0.000000e+00> : vector<8x32xf32>
    %84 = tpu.matmul %82, %83, %cst_21 {dimension_numbers = #tpu.dot_dimension_numbers<[1], [0], [0], [1], [0, 0, 1, 1], [], []>} : vector<8x8xbf16>, vector<8x32xbf16>, vector<8x32xf32> -> vector<8x32xf32>
    %cst_22 = arith.constant dense<0.000000e+00> : vector<8xf32>
    %85 = vector.multi_reduction <add>, %81, %cst_22 [1] : vector<8x8xf32> to vector<8xf32>
    %86 = vector.shape_cast %85 : vector<8xf32> to vector<8x1xf32>
    %87 = tpu.reciprocal %86 {approx = true} : vector<8x1xf32> -> vector<8x1xf32>
    %88 = vector.broadcast %87 : vector<8x1xf32> to vector<8x32xf32>
    %89 = arith.mulf %84, %88 : vector<8x32xf32>
    %90 = arith.truncf %89 : vector<8x32xf32> to vector<8x32xbf16>
    %91 = vector.extract_strided_slice %43 {offsets = [32, 0], sizes = [32, 128], strides = [1, 1]} : vector<128x128xbf16> to vector<32x128xbf16>
    %cst_23 = arith.constant dense<0.000000e+00> : vector<8x128xf32>
    %92 = tpu.matmul %90, %91, %cst_23 {dimension_numbers = #tpu.dot_dimension_numbers<[1], [0], [0], [1], [0, 0, 1, 1], [], []>} : vector<8x32xbf16>, vector<32x128xbf16>, vector<8x128xf32> -> vector<8x128xf32>
    %93 = arith.addf %71, %92 : vector<8x128xf32>
    %94 = vector.extract_strided_slice %44 {offsets = [0, 64], sizes = [8, 32], strides = [1, 1]} : vector<8x128xf32> to vector<8x32xf32>
    %95 = arith.truncf %94 : vector<8x32xf32> to vector<8x32xbf16>
    %96 = vector.extract_strided_slice %46 {offsets = [64, 0], sizes = [32, 8], strides = [1, 1]} : vector<128x8xf32> to vector<32x8xf32>
    %97 = arith.truncf %96 : vector<32x8xf32> to vector<32x8xbf16>
    %cst_24 = arith.constant dense<0.000000e+00> : vector<8x8xf32>
    %98 = tpu.matmul %95, %97, %cst_24 {dimension_numbers = #tpu.dot_dimension_numbers<[1], [0], [0], [1], [0, 0, 1, 1], [], []>} : vector<8x32xbf16>, vector<32x8xbf16>, vector<8x8xf32> -> vector<8x8xf32>
    %cst_25 = arith.constant dense<0xFF800000> : vector<8xf32>
    %99 = vector.multi_reduction <maximumf>, %98, %cst_25 [1] : vector<8x8xf32> to vector<8xf32>
    %100 = vector.shape_cast %99 : vector<8xf32> to vector<8x1xf32>
    %101 = vector.broadcast %100 : vector<8x1xf32> to vector<8x8xf32>
    %102 = arith.subf %98, %101 : vector<8x8xf32>
    %103 = math.exp %102 : vector<8x8xf32>
    %104 = arith.truncf %103 : vector<8x8xf32> to vector<8x8xbf16>
    %105 = vector.extract_strided_slice %48 {offsets = [0, 64], sizes = [8, 32], strides = [1, 1]} : vector<8x128xbf16> to vector<8x32xbf16>
    %cst_26 = arith.constant dense<0.000000e+00> : vector<8x32xf32>
    %106 = tpu.matmul %104, %105, %cst_26 {dimension_numbers = #tpu.dot_dimension_numbers<[1], [0], [0], [1], [0, 0, 1, 1], [], []>} : vector<8x8xbf16>, vector<8x32xbf16>, vector<8x32xf32> -> vector<8x32xf32>
    %cst_27 = arith.constant dense<0.000000e+00> : vector<8xf32>
    %107 = vector.multi_reduction <add>, %103, %cst_27 [1] : vector<8x8xf32> to vector<8xf32>
    %108 = vector.shape_cast %107 : vector<8xf32> to vector<8x1xf32>
    %109 = tpu.reciprocal %108 {approx = true} : vector<8x1xf32> -> vector<8x1xf32>
    %110 = vector.broadcast %109 : vector<8x1xf32> to vector<8x32xf32>
    %111 = arith.mulf %106, %110 : vector<8x32xf32>
    %112 = arith.truncf %111 : vector<8x32xf32> to vector<8x32xbf16>
    %113 = vector.extract_strided_slice %43 {offsets = [64, 0], sizes = [32, 128], strides = [1, 1]} : vector<128x128xbf16> to vector<32x128xbf16>
    %cst_28 = arith.constant dense<0.000000e+00> : vector<8x128xf32>
    %114 = tpu.matmul %112, %113, %cst_28 {dimension_numbers = #tpu.dot_dimension_numbers<[1], [0], [0], [1], [0, 0, 1, 1], [], []>} : vector<8x32xbf16>, vector<32x128xbf16>, vector<8x128xf32> -> vector<8x128xf32>
    %115 = arith.addf %93, %114 : vector<8x128xf32>
    %116 = vector.extract_strided_slice %44 {offsets = [0, 96], sizes = [8, 32], strides = [1, 1]} : vector<8x128xf32> to vector<8x32xf32>
    %117 = arith.truncf %116 : vector<8x32xf32> to vector<8x32xbf16>
    %118 = vector.extract_strided_slice %46 {offsets = [96, 0], sizes = [32, 8], strides = [1, 1]} : vector<128x8xf32> to vector<32x8xf32>
    %119 = arith.truncf %118 : vector<32x8xf32> to vector<32x8xbf16>
    %cst_29 = arith.constant dense<0.000000e+00> : vector<8x8xf32>
    %120 = tpu.matmul %117, %119, %cst_29 {dimension_numbers = #tpu.dot_dimension_numbers<[1], [0], [0], [1], [0, 0, 1, 1], [], []>} : vector<8x32xbf16>, vector<32x8xbf16>, vector<8x8xf32> -> vector<8x8xf32>
    %cst_30 = arith.constant dense<0xFF800000> : vector<8xf32>
    %121 = vector.multi_reduction <maximumf>, %120, %cst_30 [1] : vector<8x8xf32> to vector<8xf32>
    %122 = vector.shape_cast %121 : vector<8xf32> to vector<8x1xf32>
    %123 = vector.broadcast %122 : vector<8x1xf32> to vector<8x8xf32>
    %124 = arith.subf %120, %123 : vector<8x8xf32>
    %125 = math.exp %124 : vector<8x8xf32>
    %126 = arith.truncf %125 : vector<8x8xf32> to vector<8x8xbf16>
    %127 = vector.extract_strided_slice %48 {offsets = [0, 96], sizes = [8, 32], strides = [1, 1]} : vector<8x128xbf16> to vector<8x32xbf16>
    %cst_31 = arith.constant dense<0.000000e+00> : vector<8x32xf32>
    %128 = tpu.matmul %126, %127, %cst_31 {dimension_numbers = #tpu.dot_dimension_numbers<[1], [0], [0], [1], [0, 0, 1, 1], [], []>} : vector<8x8xbf16>, vector<8x32xbf16>, vector<8x32xf32> -> vector<8x32xf32>
    %cst_32 = arith.constant dense<0.000000e+00> : vector<8xf32>
    %129 = vector.multi_reduction <add>, %125, %cst_32 [1] : vector<8x8xf32> to vector<8xf32>
    %130 = vector.shape_cast %129 : vector<8xf32> to vector<8x1xf32>
    %131 = tpu.reciprocal %130 {approx = true} : vector<8x1xf32> -> vector<8x1xf32>
    %132 = vector.broadcast %131 : vector<8x1xf32> to vector<8x32xf32>
    %133 = arith.mulf %128, %132 : vector<8x32xf32>
    %134 = arith.truncf %133 : vector<8x32xf32> to vector<8x32xbf16>
    %135 = vector.extract_strided_slice %43 {offsets = [96, 0], sizes = [32, 128], strides = [1, 1]} : vector<128x128xbf16> to vector<32x128xbf16>
    %cst_33 = arith.constant dense<0.000000e+00> : vector<8x128xf32>
    %136 = tpu.matmul %134, %135, %cst_33 {dimension_numbers = #tpu.dot_dimension_numbers<[1], [0], [0], [1], [0, 0, 1, 1], [], []>} : vector<8x32xbf16>, vector<32x128xbf16>, vector<8x128xf32> -> vector<8x128xf32>
    %137 = arith.addf %115, %136 : vector<8x128xf32>
    %138 = vector.extract_strided_slice %34 {offsets = [8, 0], sizes = [8, 128], strides = [1, 1]} : vector<16x128xf32> to vector<8x128xf32>
    %139 = vector.extract_strided_slice %38 {offsets = [8, 0], sizes = [8, 128], strides = [1, 1]} : vector<16x128xf32> to vector<8x128xf32>
    %140 = tpu.transpose %139, [1, 0] : vector<8x128xf32> -> vector<128x8xf32>
    %141 = vector.extract_strided_slice %42 {offsets = [8, 0], sizes = [8, 128], strides = [1, 1]} : vector<16x128xf32> to vector<8x128xf32>
    %142 = arith.truncf %141 : vector<8x128xf32> to vector<8x128xbf16>
    %cst_34 = arith.constant 0.000000e+00 : f32
    %143 = vector.broadcast %cst_34 : f32 to vector<8x128xf32>
    %144 = vector.extract_strided_slice %138 {offsets = [0, 0], sizes = [8, 32], strides = [1, 1]} : vector<8x128xf32> to vector<8x32xf32>
    %145 = arith.truncf %144 : vector<8x32xf32> to vector<8x32xbf16>
    %146 = vector.extract_strided_slice %140 {offsets = [0, 0], sizes = [32, 8], strides = [1, 1]} : vector<128x8xf32> to vector<32x8xf32>
    %147 = arith.truncf %146 : vector<32x8xf32> to vector<32x8xbf16>
    %cst_35 = arith.constant dense<0.000000e+00> : vector<8x8xf32>
    %148 = tpu.matmul %145, %147, %cst_35 {dimension_numbers = #tpu.dot_dimension_numbers<[1], [0], [0], [1], [0, 0, 1, 1], [], []>} : vector<8x32xbf16>, vector<32x8xbf16>, vector<8x8xf32> -> vector<8x8xf32>
    %cst_36 = arith.constant dense<0xFF800000> : vector<8xf32>
    %149 = vector.multi_reduction <maximumf>, %148, %cst_36 [1] : vector<8x8xf32> to vector<8xf32>
    %150 = vector.shape_cast %149 : vector<8xf32> to vector<8x1xf32>
    %151 = vector.broadcast %150 : vector<8x1xf32> to vector<8x8xf32>
    %152 = arith.subf %148, %151 : vector<8x8xf32>
    %153 = math.exp %152 : vector<8x8xf32>
    %154 = arith.truncf %153 : vector<8x8xf32> to vector<8x8xbf16>
    %155 = vector.extract_strided_slice %142 {offsets = [0, 0], sizes = [8, 32], strides = [1, 1]} : vector<8x128xbf16> to vector<8x32xbf16>
    %cst_37 = arith.constant dense<0.000000e+00> : vector<8x32xf32>
    %156 = tpu.matmul %154, %155, %cst_37 {dimension_numbers = #tpu.dot_dimension_numbers<[1], [0], [0], [1], [0, 0, 1, 1], [], []>} : vector<8x8xbf16>, vector<8x32xbf16>, vector<8x32xf32> -> vector<8x32xf32>
    %cst_38 = arith.constant dense<0.000000e+00> : vector<8xf32>
    %157 = vector.multi_reduction <add>, %153, %cst_38 [1] : vector<8x8xf32> to vector<8xf32>
    %158 = vector.shape_cast %157 : vector<8xf32> to vector<8x1xf32>
    %159 = tpu.reciprocal %158 {approx = true} : vector<8x1xf32> -> vector<8x1xf32>
    %160 = vector.broadcast %159 : vector<8x1xf32> to vector<8x32xf32>
    %161 = arith.mulf %156, %160 : vector<8x32xf32>
    %162 = arith.truncf %161 : vector<8x32xf32> to vector<8x32xbf16>
    %163 = vector.extract_strided_slice %43 {offsets = [0, 0], sizes = [32, 128], strides = [1, 1]} : vector<128x128xbf16> to vector<32x128xbf16>
    %cst_39 = arith.constant dense<0.000000e+00> : vector<8x128xf32>
    %164 = tpu.matmul %162, %163, %cst_39 {dimension_numbers = #tpu.dot_dimension_numbers<[1], [0], [0], [1], [0, 0, 1, 1], [], []>} : vector<8x32xbf16>, vector<32x128xbf16>, vector<8x128xf32> -> vector<8x128xf32>
    %165 = arith.addf %143, %164 : vector<8x128xf32>
    %166 = vector.extract_strided_slice %138 {offsets = [0, 32], sizes = [8, 32], strides = [1, 1]} : vector<8x128xf32> to vector<8x32xf32>
    %167 = arith.truncf %166 : vector<8x32xf32> to vector<8x32xbf16>
    %168 = vector.extract_strided_slice %140 {offsets = [32, 0], sizes = [32, 8], strides = [1, 1]} : vector<128x8xf32> to vector<32x8xf32>
    %169 = arith.truncf %168 : vector<32x8xf32> to vector<32x8xbf16>
    %cst_40 = arith.constant dense<0.000000e+00> : vector<8x8xf32>
    %170 = tpu.matmul %167, %169, %cst_40 {dimension_numbers = #tpu.dot_dimension_numbers<[1], [0], [0], [1], [0, 0, 1, 1], [], []>} : vector<8x32xbf16>, vector<32x8xbf16>, vector<8x8xf32> -> vector<8x8xf32>
    %cst_41 = arith.constant dense<0xFF800000> : vector<8xf32>
    %171 = vector.multi_reduction <maximumf>, %170, %cst_41 [1] : vector<8x8xf32> to vector<8xf32>
    %172 = vector.shape_cast %171 : vector<8xf32> to vector<8x1xf32>
    %173 = vector.broadcast %172 : vector<8x1xf32> to vector<8x8xf32>
    %174 = arith.subf %170, %173 : vector<8x8xf32>
    %175 = math.exp %174 : vector<8x8xf32>
    %176 = arith.truncf %175 : vector<8x8xf32> to vector<8x8xbf16>
    %177 = vector.extract_strided_slice %142 {offsets = [0, 32], sizes = [8, 32], strides = [1, 1]} : vector<8x128xbf16> to vector<8x32xbf16>
    %cst_42 = arith.constant dense<0.000000e+00> : vector<8x32xf32>
    %178 = tpu.matmul %176, %177, %cst_42 {dimension_numbers = #tpu.dot_dimension_numbers<[1], [0], [0], [1], [0, 0, 1, 1], [], []>} : vector<8x8xbf16>, vector<8x32xbf16>, vector<8x32xf32> -> vector<8x32xf32>
    %cst_43 = arith.constant dense<0.000000e+00> : vector<8xf32>
    %179 = vector.multi_reduction <add>, %175, %cst_43 [1] : vector<8x8xf32> to vector<8xf32>
    %180 = vector.shape_cast %179 : vector<8xf32> to vector<8x1xf32>
    %181 = tpu.reciprocal %180 {approx = true} : vector<8x1xf32> -> vector<8x1xf32>
    %182 = vector.broadcast %181 : vector<8x1xf32> to vector<8x32xf32>
    %183 = arith.mulf %178, %182 : vector<8x32xf32>
    %184 = arith.truncf %183 : vector<8x32xf32> to vector<8x32xbf16>
    %185 = vector.extract_strided_slice %43 {offsets = [32, 0], sizes = [32, 128], strides = [1, 1]} : vector<128x128xbf16> to vector<32x128xbf16>
    %cst_44 = arith.constant dense<0.000000e+00> : vector<8x128xf32>
    %186 = tpu.matmul %184, %185, %cst_44 {dimension_numbers = #tpu.dot_dimension_numbers<[1], [0], [0], [1], [0, 0, 1, 1], [], []>} : vector<8x32xbf16>, vector<32x128xbf16>, vector<8x128xf32> -> vector<8x128xf32>
    %187 = arith.addf %165, %186 : vector<8x128xf32>
    %188 = vector.extract_strided_slice %138 {offsets = [0, 64], sizes = [8, 32], strides = [1, 1]} : vector<8x128xf32> to vector<8x32xf32>
    %189 = arith.truncf %188 : vector<8x32xf32> to vector<8x32xbf16>
    %190 = vector.extract_strided_slice %140 {offsets = [64, 0], sizes = [32, 8], strides = [1, 1]} : vector<128x8xf32> to vector<32x8xf32>
    %191 = arith.truncf %190 : vector<32x8xf32> to vector<32x8xbf16>
    %cst_45 = arith.constant dense<0.000000e+00> : vector<8x8xf32>
    %192 = tpu.matmul %189, %191, %cst_45 {dimension_numbers = #tpu.dot_dimension_numbers<[1], [0], [0], [1], [0, 0, 1, 1], [], []>} : vector<8x32xbf16>, vector<32x8xbf16>, vector<8x8xf32> -> vector<8x8xf32>
    %cst_46 = arith.constant dense<0xFF800000> : vector<8xf32>
    %193 = vector.multi_reduction <maximumf>, %192, %cst_46 [1] : vector<8x8xf32> to vector<8xf32>
    %194 = vector.shape_cast %193 : vector<8xf32> to vector<8x1xf32>
    %195 = vector.broadcast %194 : vector<8x1xf32> to vector<8x8xf32>
    %196 = arith.subf %192, %195 : vector<8x8xf32>
    %197 = math.exp %196 : vector<8x8xf32>
    %198 = arith.truncf %197 : vector<8x8xf32> to vector<8x8xbf16>
    %199 = vector.extract_strided_slice %142 {offsets = [0, 64], sizes = [8, 32], strides = [1, 1]} : vector<8x128xbf16> to vector<8x32xbf16>
    %cst_47 = arith.constant dense<0.000000e+00> : vector<8x32xf32>
    %200 = tpu.matmul %198, %199, %cst_47 {dimension_numbers = #tpu.dot_dimension_numbers<[1], [0], [0], [1], [0, 0, 1, 1], [], []>} : vector<8x8xbf16>, vector<8x32xbf16>, vector<8x32xf32> -> vector<8x32xf32>
    %cst_48 = arith.constant dense<0.000000e+00> : vector<8xf32>
    %201 = vector.multi_reduction <add>, %197, %cst_48 [1] : vector<8x8xf32> to vector<8xf32>
    %202 = vector.shape_cast %201 : vector<8xf32> to vector<8x1xf32>
    %203 = tpu.reciprocal %202 {approx = true} : vector<8x1xf32> -> vector<8x1xf32>
    %204 = vector.broadcast %203 : vector<8x1xf32> to vector<8x32xf32>
    %205 = arith.mulf %200, %204 : vector<8x32xf32>
    %206 = arith.truncf %205 : vector<8x32xf32> to vector<8x32xbf16>
    %207 = vector.extract_strided_slice %43 {offsets = [64, 0], sizes = [32, 128], strides = [1, 1]} : vector<128x128xbf16> to vector<32x128xbf16>
    %cst_49 = arith.constant dense<0.000000e+00> : vector<8x128xf32>
    %208 = tpu.matmul %206, %207, %cst_49 {dimension_numbers = #tpu.dot_dimension_numbers<[1], [0], [0], [1], [0, 0, 1, 1], [], []>} : vector<8x32xbf16>, vector<32x128xbf16>, vector<8x128xf32> -> vector<8x128xf32>
    %209 = arith.addf %187, %208 : vector<8x128xf32>
    %210 = vector.extract_strided_slice %138 {offsets = [0, 96], sizes = [8, 32], strides = [1, 1]} : vector<8x128xf32> to vector<8x32xf32>
    %211 = arith.truncf %210 : vector<8x32xf32> to vector<8x32xbf16>
    %212 = vector.extract_strided_slice %140 {offsets = [96, 0], sizes = [32, 8], strides = [1, 1]} : vector<128x8xf32> to vector<32x8xf32>
    %213 = arith.truncf %212 : vector<32x8xf32> to vector<32x8xbf16>
    %cst_50 = arith.constant dense<0.000000e+00> : vector<8x8xf32>
    %214 = tpu.matmul %211, %213, %cst_50 {dimension_numbers = #tpu.dot_dimension_numbers<[1], [0], [0], [1], [0, 0, 1, 1], [], []>} : vector<8x32xbf16>, vector<32x8xbf16>, vector<8x8xf32> -> vector<8x8xf32>
    %cst_51 = arith.constant dense<0xFF800000> : vector<8xf32>
    %215 = vector.multi_reduction <maximumf>, %214, %cst_51 [1] : vector<8x8xf32> to vector<8xf32>
    %216 = vector.shape_cast %215 : vector<8xf32> to vector<8x1xf32>
    %217 = vector.broadcast %216 : vector<8x1xf32> to vector<8x8xf32>
    %218 = arith.subf %214, %217 : vector<8x8xf32>
    %219 = math.exp %218 : vector<8x8xf32>
    %220 = arith.truncf %219 : vector<8x8xf32> to vector<8x8xbf16>
    %221 = vector.extract_strided_slice %142 {offsets = [0, 96], sizes = [8, 32], strides = [1, 1]} : vector<8x128xbf16> to vector<8x32xbf16>
    %cst_52 = arith.constant dense<0.000000e+00> : vector<8x32xf32>
    %222 = tpu.matmul %220, %221, %cst_52 {dimension_numbers = #tpu.dot_dimension_numbers<[1], [0], [0], [1], [0, 0, 1, 1], [], []>} : vector<8x8xbf16>, vector<8x32xbf16>, vector<8x32xf32> -> vector<8x32xf32>
    %cst_53 = arith.constant dense<0.000000e+00> : vector<8xf32>
    %223 = vector.multi_reduction <add>, %219, %cst_53 [1] : vector<8x8xf32> to vector<8xf32>
    %224 = vector.shape_cast %223 : vector<8xf32> to vector<8x1xf32>
    %225 = tpu.reciprocal %224 {approx = true} : vector<8x1xf32> -> vector<8x1xf32>
    %226 = vector.broadcast %225 : vector<8x1xf32> to vector<8x32xf32>
    %227 = arith.mulf %222, %226 : vector<8x32xf32>
    %228 = arith.truncf %227 : vector<8x32xf32> to vector<8x32xbf16>
    %229 = vector.extract_strided_slice %43 {offsets = [96, 0], sizes = [32, 128], strides = [1, 1]} : vector<128x128xbf16> to vector<32x128xbf16>
    %cst_54 = arith.constant dense<0.000000e+00> : vector<8x128xf32>
    %230 = tpu.matmul %228, %229, %cst_54 {dimension_numbers = #tpu.dot_dimension_numbers<[1], [0], [0], [1], [0, 0, 1, 1], [], []>} : vector<8x32xbf16>, vector<32x128xbf16>, vector<8x128xf32> -> vector<8x128xf32>
    %231 = arith.addf %209, %230 : vector<8x128xf32>
    %232 = tpu.concatenate %137, %231 in 0 : vector<8x128xf32>, vector<8x128xf32> -> vector<16x128xf32>
    %233 = vector.extract_strided_slice %1 {offsets = [3, 0], sizes = [1, 128], strides = [1, 1]} : vector<16x128xf32> to vector<1x128xf32>
    %234 = vector.broadcast %233 : vector<1x128xf32> to vector<16x128xf32>
    %235 = arith.addf %232, %234 : vector<16x128xf32>
    %236 = arith.addf %0, %235 : vector<16x128xf32>
    %237 = vector.extract_strided_slice %1 {offsets = [6, 0], sizes = [1, 128], strides = [1, 1]} : vector<16x128xf32> to vector<1x128xf32>
    %238 = vector.extract_strided_slice %1 {offsets = [7, 0], sizes = [1, 128], strides = [1, 1]} : vector<16x128xf32> to vector<1x128xf32>
    %cst_55 = arith.constant dense<0.000000e+00> : vector<16xf32>
    %239 = vector.multi_reduction <add>, %236, %cst_55 [1] : vector<16x128xf32> to vector<16xf32>
    %240 = vector.shape_cast %239 : vector<16xf32> to vector<16x1xf32>
    %cst_56 = arith.constant 1.280000e+02 : f32
    %241 = vector.broadcast %cst_56 : f32 to vector<16x1xf32>
    %242 = arith.divf %240, %241 : vector<16x1xf32>
    %243 = vector.broadcast %242 : vector<16x1xf32> to vector<16x128xf32>
    %244 = arith.subf %236, %243 : vector<16x128xf32>
    %245 = arith.mulf %244, %244 : vector<16x128xf32>
    %cst_57 = arith.constant dense<0.000000e+00> : vector<16xf32>
    %246 = vector.multi_reduction <add>, %245, %cst_57 [1] : vector<16x128xf32> to vector<16xf32>
    %247 = vector.shape_cast %246 : vector<16xf32> to vector<16x1xf32>
    %cst_58 = arith.constant 1.280000e+02 : f32
    %248 = vector.broadcast %cst_58 : f32 to vector<16x1xf32>
    %249 = arith.divf %247, %248 : vector<16x1xf32>
    %250 = vector.broadcast %242 : vector<16x1xf32> to vector<16x128xf32>
    %251 = arith.subf %236, %250 : vector<16x128xf32>
    %cst_59 = arith.constant 9.99999974E-6 : f32
    %252 = vector.broadcast %cst_59 : f32 to vector<16x1xf32>
    %253 = arith.addf %249, %252 : vector<16x1xf32>
    %254 = math.rsqrt %253 : vector<16x1xf32>
    %255 = vector.broadcast %254 : vector<16x1xf32> to vector<16x128xf32>
    %256 = arith.mulf %251, %255 : vector<16x128xf32>
    %257 = vector.broadcast %237 : vector<1x128xf32> to vector<16x128xf32>
    %258 = arith.mulf %256, %257 : vector<16x128xf32>
    %259 = vector.broadcast %238 : vector<1x128xf32> to vector<16x128xf32>
    %260 = arith.addf %258, %259 : vector<16x128xf32>
    %261 = vector.extract_strided_slice %1 {offsets = [8, 0], sizes = [1, 128], strides = [1, 1]} : vector<16x128xf32> to vector<1x128xf32>
    %262 = vector.extract_strided_slice %1 {offsets = [9, 0], sizes = [1, 128], strides = [1, 1]} : vector<16x128xf32> to vector<1x128xf32>
    %cst_60 = arith.constant dense<0.000000e+00> : vector<16xf32>
    %263 = vector.multi_reduction <add>, %260, %cst_60 [1] : vector<16x128xf32> to vector<16xf32>
    %264 = vector.shape_cast %263 : vector<16xf32> to vector<16x1xf32>
    %cst_61 = arith.constant 1.280000e+02 : f32
    %265 = vector.broadcast %cst_61 : f32 to vector<16x1xf32>
    %266 = arith.divf %264, %265 : vector<16x1xf32>
    %267 = vector.broadcast %266 : vector<16x1xf32> to vector<16x128xf32>
    %268 = arith.subf %260, %267 : vector<16x128xf32>
    %269 = arith.mulf %268, %268 : vector<16x128xf32>
    %cst_62 = arith.constant dense<0.000000e+00> : vector<16xf32>
    %270 = vector.multi_reduction <add>, %269, %cst_62 [1] : vector<16x128xf32> to vector<16xf32>
    %271 = vector.shape_cast %270 : vector<16xf32> to vector<16x1xf32>
    %cst_63 = arith.constant 1.280000e+02 : f32
    %272 = vector.broadcast %cst_63 : f32 to vector<16x1xf32>
    %273 = arith.divf %271, %272 : vector<16x1xf32>
    %274 = vector.broadcast %266 : vector<16x1xf32> to vector<16x128xf32>
    %275 = arith.subf %260, %274 : vector<16x128xf32>
    %cst_64 = arith.constant 9.99999974E-6 : f32
    %276 = vector.broadcast %cst_64 : f32 to vector<16x1xf32>
    %277 = arith.addf %273, %276 : vector<16x1xf32>
    %278 = math.rsqrt %277 : vector<16x1xf32>
    %279 = vector.broadcast %278 : vector<16x1xf32> to vector<16x128xf32>
    %280 = arith.mulf %275, %279 : vector<16x128xf32>
    %281 = vector.broadcast %261 : vector<1x128xf32> to vector<16x128xf32>
    %282 = arith.mulf %280, %281 : vector<16x128xf32>
    %283 = vector.broadcast %262 : vector<1x128xf32> to vector<16x128xf32>
    %284 = arith.addf %282, %283 : vector<16x128xf32>
    %285 = arith.truncf %284 : vector<16x128xf32> to vector<16x128xbf16>
    %c0_65 = arith.constant 0 : index
    %c0_66 = arith.constant 0 : index
    %286 = vector.load %arg4[%c0_65, %c0_66] : memref<128x256xbf16, #tpu.memory_space<vmem>>, vector<128x256xbf16>
    %cst_67 = arith.constant dense<0.000000e+00> : vector<16x256xf32>
    %287 = tpu.matmul %285, %286, %cst_67 {dimension_numbers = #tpu.dot_dimension_numbers<[1], [0], [0], [1], [0, 0, 1, 1], [], []>} : vector<16x128xbf16>, vector<128x256xbf16>, vector<16x256xf32> -> vector<16x256xf32>
    %c0_68 = arith.constant 0 : index
    %c0_69 = arith.constant 0 : index
    %288 = vector.load %arg6[%c0_68, %c0_69] : memref<1x256xf32, #tpu.memory_space<vmem>>, vector<1x256xf32>
    %289 = vector.broadcast %288 : vector<1x256xf32> to vector<16x256xf32>
    %290 = arith.addf %287, %289 : vector<16x256xf32>
    %cst_70 = arith.constant 5.000000e-01 : f32
    %291 = vector.broadcast %cst_70 : f32 to vector<16x256xf32>
    %292 = arith.mulf %291, %290 : vector<16x256xf32>
    %cst_71 = arith.constant 0.707106769 : f32
    %293 = vector.broadcast %cst_71 : f32 to vector<16x256xf32>
    %294 = arith.mulf %290, %293 : vector<16x256xf32>
    %295 = math.erf %294 : vector<16x256xf32>
    %cst_72 = arith.constant 1.000000e+00 : f32
    %296 = vector.broadcast %cst_72 : f32 to vector<16x256xf32>
    %297 = arith.addf %296, %295 : vector<16x256xf32>
    %298 = arith.mulf %292, %297 : vector<16x256xf32>
    %299 = arith.truncf %298 : vector<16x256xf32> to vector<16x256xbf16>
    %c0_73 = arith.constant 0 : index
    %c0_74 = arith.constant 0 : index
    %300 = vector.load %arg5[%c0_73, %c0_74] : memref<256x128xbf16, #tpu.memory_space<vmem>>, vector<256x128xbf16>
    %cst_75 = arith.constant dense<0.000000e+00> : vector<16x128xf32>
    %301 = tpu.matmul %299, %300, %cst_75 {dimension_numbers = #tpu.dot_dimension_numbers<[1], [0], [0], [1], [0, 0, 1, 1], [], []>} : vector<16x256xbf16>, vector<256x128xbf16>, vector<16x128xf32> -> vector<16x128xf32>
    %302 = vector.extract_strided_slice %1 {offsets = [10, 0], sizes = [1, 128], strides = [1, 1]} : vector<16x128xf32> to vector<1x128xf32>
    %303 = vector.broadcast %302 : vector<1x128xf32> to vector<16x128xf32>
    %304 = arith.addf %301, %303 : vector<16x128xf32>
    %305 = arith.addf %236, %304 : vector<16x128xf32>
    %c0_76 = arith.constant 0 : index
    %c0_77 = arith.constant 0 : index
    %306 = vector.load %arg8[%c0_76, %c0_77] : memref<16x128xf32, #tpu.memory_space<vmem>>, vector<16x128xf32>
    tpu.vector_store %arg8[%c0_76, %c0_77], %305 {strides = array<i32>} : memref<16x128xf32, #tpu.memory_space<vmem>>, vector<16x128xf32>,
    return
  }
  func.func @transform_0(%arg0: i32) -> (i32, i32) {
    %c0_i32 = arith.constant 0 : i32
    %c0_i32_0 = arith.constant 0 : i32
    return %arg0, %c0_i32 : i32, i32
  }
  func.func @transform_1(%arg0: i32) -> (i32, i32) {
    %c0_i32 = arith.constant 0 : i32
    %c0_i32_0 = arith.constant 0 : i32
    %c0_i32_1 = arith.constant 0 : i32
    return %c0_i32, %c0_i32_0 : i32, i32
  }
  func.func @transform_2(%arg0: i32) -> (i32, i32) {
    %c0_i32 = arith.constant 0 : i32
    %c0_i32_0 = arith.constant 0 : i32
    %c0_i32_1 = arith.constant 0 : i32
    return %c0_i32, %c0_i32_0 : i32, i32
  }
  func.func @transform_3(%arg0: i32) -> (i32, i32) {
    %c0_i32 = arith.constant 0 : i32
    %c0_i32_0 = arith.constant 0 : i32
    %c0_i32_1 = arith.constant 0 : i32
    return %c0_i32, %c0_i32_0 : i32, i32
  }
  func.func @transform_4(%arg0: i32) -> (i32, i32) {
    %c0_i32 = arith.constant 0 : i32
    %c0_i32_0 = arith.constant 0 : i32
    %c0_i32_1 = arith.constant 0 : i32
    return %c0_i32, %c0_i32_0 : i32, i32
  }
  func.func @transform_5(%arg0: i32) -> (i32, i32) {
    %c0_i32 = arith.constant 0 : i32
    %c0_i32_0 = arith.constant 0 : i32
    %c0_i32_1 = arith.constant 0 : i32
    return %c0_i32, %c0_i32_0 : i32, i32
  }
  func.func @transform_6(%arg0: i32) -> (i32, i32) {
    %c0_i32 = arith.constant 0 : i32
    %c0_i32_0 = arith.constant 0 : i32
    %c0_i32_1 = arith.constant 0 : i32
    return %c0_i32, %c0_i32_0 : i32, i32
  }
  func.func @transform_7(%arg0: i32) -> (i32, i32) {
    %c0_i32 = arith.constant 0 : i32
    %c0_i32_0 = arith.constant 0 : i32
    return %arg0, %c0_i32 : i32, i32
  }
}

</mosaic_0001>

<llo_original>
// kernel: tpu_custom_call.1
$region0: #{tpu_custom_call.1}
  #allocation0 [shape = 'u32[]', space=smem, size = 0x4, offset = 0x4, fixed_abs, tag = 'smem constant byte address 0x4 - core index']
  #allocation1 [shape = 'u32[144,128]{1,0:T(1,128)}', space=vmem, size = 0x12000, scoped, tag = 'internal scratch']
  %s0 = inlined_call_operand.hbm [shape: f32[16,128], index: 0, kind: input, shape index: {}]
  %s1 = inlined_call_operand.hbm [shape: bf16[128,384], index: 1, kind: input, shape index: {}]
  %s2 = inlined_call_operand.hbm [shape: bf16[128,128], index: 2, kind: input, shape index: {}]
  %s3 = inlined_call_operand.hbm [shape: bf16[128,256], index: 3, kind: input, shape index: {}]
  %s4 = inlined_call_operand.hbm [shape: bf16[256,128], index: 4, kind: input, shape index: {}]
  %s5 = inlined_call_operand.vmem [shape: f32[1,256], index: 5, kind: input, shape index: {}]
  %s6 = inlined_call_operand.vmem [shape: f32[16,128], index: 6, kind: input, shape index: {}]
  %s7 = inlined_call_operand.hbm [shape: f32[16,128], index: 7, kind: output, shape index: {}]
  %s8 = sld [smem:[#allocation0]]
  $region58: #{tpu_custom_call.1} parent=0
    _
  %s10 = ssub.s32 1, %s8
  %s11 = scalar_select 0, %s10, %s8
  $region1: #{tpu_custom_call.1} parent=0
    #allocation2 [shape = 'u8[8192]{0}', space=vmem, size = 0x2000, scoped, tag = 'input window, operand 0, single buffered']
    #allocation3 [shape = 's32[1]{0}', space=sflag, size = 0x4, scoped, tag = 'scoped memory for tpu_custom_call.1']
    #allocation4 [shape = 's32[1]{0}', space=sflag, size = 0x4, scoped, tag = 'scoped memory for tpu_custom_call.1']
    #allocation5 [shape = 'u8[98304]{0}', space=vmem, size = 0x18000, scoped, tag = 'input window, operand 1, single buffered']
    #allocation6 [shape = 's32[1]{0}', space=sflag, size = 0x4, scoped, tag = 'scoped memory for tpu_custom_call.1']
    #allocation7 [shape = 'u8[32768]{0}', space=vmem, size = 0x8000, scoped, tag = 'input window, operand 2, single buffered']
    #allocation8 [shape = 'u8[65536]{0}', space=vmem, size = 0x10000, scoped, tag = 'input window, operand 3, single buffered']
    #allocation9 [shape = 's32[1]{0}', space=sflag, size = 0x4, scoped, tag = 'scoped memory for tpu_custom_call.1']
    #allocation10 [shape = 'u8[65536]{0}', space=vmem, size = 0x10000, scoped, tag = 'input window, operand 4, single buffered']
    #allocation11 [shape = 'u8[8192]{0}', space=vmem, size = 0x2000, scoped, tag = 'output window, operand 0, single buffered']
    %12 = vsyncpa [#allocation3], 0
    %13 = vsyncpa [#allocation6], 0
    %14 = vsyncpa [#allocation9], 0
    %15 = vsyncpa [#allocation4], 0
    // Predicated region
    $region2: #{tpu_custom_call.1} parent=1 // pred_check
      _
    $region3: #{tpu_custom_call.1} parent=1 // pred_check_branch
      %17 = sbr.rel (0) target = $region5
    $region4: #{tpu_custom_call.1} parent=1 // pred_region
      %s19 = ssub.s32 256, 256
      %20 = vsyncadd [#allocation3], %s19
      %s21 = sshll.u32 [#allocation2], 4
      %s22 = int_to_ptr.vmem [resolvable:$true] %s21
      %27 = dma.hbm_to_vmem [thread:$0]  %s0, 256, %s22, [#allocation3], 128, 128, 8
    $region5: #{tpu_custom_call.1} parent=1 // pred_fallthru
      _
    // Predicated region
    $region6: #{tpu_custom_call.1} parent=1 // pred_check
      _
    $region7: #{tpu_custom_call.1} parent=1 // pred_check_branch
      %29 = sbr.rel (0) target = $region9
    $region8: #{tpu_custom_call.1} parent=1 // pred_region
      %s31 = ssub.s32 3072, 3072
      %32 = vsyncadd [#allocation6], %s31
      %s33 = sshll.u32 [#allocation5], 4
      %s34 = int_to_ptr.vmem [resolvable:$true] %s33
      %39 = dma.hbm_to_vmem [thread:$0]  %s1, 3072, %s34, [#allocation6], 192, 192, 12
    $region9: #{tpu_custom_call.1} parent=1 // pred_fallthru
      _
    // Predicated region
    $region10: #{tpu_custom_call.1} parent=1 // pred_check
      _
    $region11: #{tpu_custom_call.1} parent=1 // pred_check_branch
      %41 = sbr.rel (0) target = $region13
    $region12: #{tpu_custom_call.1} parent=1 // pred_region
      %s43 = ssub.s32 1024, 1024
      %44 = vsyncadd [#allocation6], %s43
      %s45 = sshll.u32 [#allocation7], 4
      %s46 = int_to_ptr.vmem [resolvable:$true] %s45
      %51 = dma.hbm_to_vmem [thread:$0]  %s2, 1024, %s46, [#allocation6], 64, 64, 4
    $region13: #{tpu_custom_call.1} parent=1 // pred_fallthru
      _
    // Predicated region
    $region14: #{tpu_custom_call.1} parent=1 // pred_check
      _
    $region15: #{tpu_custom_call.1} parent=1 // pred_check_branch
      %53 = sbr.rel (0) target = $region17
    $region16: #{tpu_custom_call.1} parent=1 // pred_region
      %s55 = ssub.s32 2048, 2048
      %56 = vsyncadd [#allocation9], %s55
      %s57 = sshll.u32 [#allocation8], 4
      %s58 = int_to_ptr.vmem [resolvable:$true] %s57
      %63 = dma.hbm_to_vmem [thread:$0]  %s3, 2048, %s58, [#allocation9], 128, 128, 8
    $region17: #{tpu_custom_call.1} parent=1 // pred_fallthru
      _
    // Predicated region
    $region18: #{tpu_custom_call.1} parent=1 // pred_check
      _
    $region19: #{tpu_custom_call.1} parent=1 // pred_check_branch
      %65 = sbr.rel (0) target = $region21
    $region20: #{tpu_custom_call.1} parent=1 // pred_region
      %s67 = ssub.s32 2048, 2048
      %68 = vsyncadd [#allocation9], %s67
      %s69 = sshll.u32 [#allocation10], 4
      %s70 = int_to_ptr.vmem [resolvable:$true] %s69
      %75 = dma.hbm_to_vmem [thread:$0]  %s4, 2048, %s70, [#allocation9], 64, 64, 4
    $region21: #{tpu_custom_call.1} parent=1 // pred_fallthru
      _
    // Predicated region
    $region22: #{tpu_custom_call.1} parent=1 // pred_check
      _
    $region23: #{tpu_custom_call.1} parent=1 // pred_check_branch
      %77 = sbr.rel (0) target = $region25
    $region24: #{tpu_custom_call.1} parent=1 // pred_region
      _
    $region25: #{tpu_custom_call.1} parent=1 // pred_fallthru
      _
    // Predicated region
    $region26: #{tpu_custom_call.1} parent=1 // pred_check
      _
    $region27: #{tpu_custom_call.1} parent=1 // pred_check_branch
      %79 = sbr.rel (0) target = $region29
    $region28: #{tpu_custom_call.1} parent=1 // pred_region
      _
    $region29: #{tpu_custom_call.1} parent=1 // pred_fallthru
      _
    // Predicated region
    $region30: #{tpu_custom_call.1} parent=1 // pred_check
      _
    $region31: #{tpu_custom_call.1} parent=1 // pred_check_branch
      %81 = sbr.rel (0) target = $region33
    $region32: #{tpu_custom_call.1} parent=1 // pred_region
      %82 = dma.done [#allocation3], 256
    $region33: #{tpu_custom_call.1} parent=1 // pred_fallthru
      _
    // Predicated region
    $region34: #{tpu_custom_call.1} parent=1 // pred_check
      _
    $region35: #{tpu_custom_call.1} parent=1 // pred_check_branch
      %84 = sbr.rel (0) target = $region37
    $region36: #{tpu_custom_call.1} parent=1 // pred_region
      %85 = dma.done [#allocation6], 3072
    $region37: #{tpu_custom_call.1} parent=1 // pred_fallthru
      _
    // Predicated region
    $region38: #{tpu_custom_call.1} parent=1 // pred_check
      _
    $region39: #{tpu_custom_call.1} parent=1 // pred_check_branch
      %87 = sbr.rel (0) target = $region41
    $region40: #{tpu_custom_call.1} parent=1 // pred_region
      %88 = dma.done [#allocation6], 1024
    $region41: #{tpu_custom_call.1} parent=1 // pred_fallthru
      _
    // Predicated region
    $region42: #{tpu_custom_call.1} parent=1 // pred_check
      _
    $region43: #{tpu_custom_call.1} parent=1 // pred_check_branch
      %90 = sbr.rel (0) target = $region45
    $region44: #{tpu_custom_call.1} parent=1 // pred_region
      %91 = dma.done [#allocation9], 2048
    $region45: #{tpu_custom_call.1} parent=1 // pred_fallthru
      _
    // Predicated region
    $region46: #{tpu_custom_call.1} parent=1 // pred_check
      _
    $region47: #{tpu_custom_call.1} parent=1 // pred_check_branch
      %93 = sbr.rel (0) target = $region49
    $region48: #{tpu_custom_call.1} parent=1 // pred_region
      %94 = dma.done [#allocation9], 2048
    $region49: #{tpu_custom_call.1} parent=1 // pred_fallthru
      _
    %v96 = vld [vmem:[#allocation2] sm:$0xff]
    %v97 = vld [vmem:[#allocation2 + $0x8] sm:$0xff]
    %v98 = vld [vmem:[%s6] sm:$0xff]
    %v99 = vld [vmem:[%s6 + $0x8] sm:$0xff]
    %100 = vadd.xlane.f32.xlu0 %v96
    %v101 = vpop.xlane.xlu0 %100
    %102 = vadd.xlane.f32.xlu0 %v97
    %v103 = vpop.xlane.xlu0 %102
    %v104 = vrcp.pop 128.0
    %v105 = vmul.f32 %v101, %v104
    %v106 = vmul.f32 %v103, %v104
    %v107 = vsub.f32 %v96, %v105
    %v108 = vsub.f32 %v97, %v106
    %v109 = vmul.f32 %v107, %v107
    %v110 = vmul.f32 %v108, %v108
    %111 = vadd.xlane.f32.xlu0 %v109
    %v112 = vpop.xlane.xlu0 %111
    %113 = vadd.xlane.f32.xlu0 %v110
    %v114 = vpop.xlane.xlu0 %113
    %v115 = vmul.f32 %v112, %v104
    %v116 = vmul.f32 %v114, %v104
    %v117 = vadd.f32 %v115, 1e-05
    %v118 = vadd.f32 %v116, 1e-05
    %v119 = vrsqrt.pop %v117
    %v120 = vrsqrt.pop %v118
    %v121 = vmul.f32 %v107, %v119
    %v122 = vmul.f32 %v108, %v120
    %v123 = vlaneseq
    %v124 = vshrl.u32 %v123, 7
    %v125 = vsub.s32 4, %v124
    %v126 = vrot.slane %v98, %v125
    %v127 = vmul.f32 %v121, %v126
    %v128 = vmul.f32 %v122, %v126
    %v129 = vlaneseq
    %v130 = vshrl.u32 %v129, 7
    %v131 = vsub.s32 5, %v130
    %v132 = vrot.slane %v98, %v131
    %v133 = vadd.f32 %v127, %v132
    %v134 = vadd.f32 %v128, %v132
    %v135 = vpack.c.bf16 %v134, %v133
    %v136 = vld [vmem:[#allocation5] sm:$0xff]
    %v137 = vld [vmem:[#allocation5 + $0x8] sm:$0xf]
    %v138 = vld [vmem:[#allocation5 + $0xc] sm:$0xff]
    %v139 = vld [vmem:[#allocation5 + $0x14] sm:$0xf]
    %v140 = vld [vmem:[#allocation5 + $0x18] sm:$0xff]
    %v141 = vld [vmem:[#allocation5 + $0x20] sm:$0xf]
    %v142 = vld [vmem:[#allocation5 + $0x24] sm:$0xff]
    %v143 = vld [vmem:[#allocation5 + $0x2c] sm:$0xf]
    %v144 = vld [vmem:[#allocation5 + $0x30] sm:$0xff]
    %v145 = vld [vmem:[#allocation5 + $0x38] sm:$0xf]
    %v146 = vld [vmem:[#allocation5 + $0x3c] sm:$0xff]
    %v147 = vld [vmem:[#allocation5 + $0x44] sm:$0xf]
    %v148 = vld [vmem:[#allocation5 + $0x48] sm:$0xff]
    %v149 = vld [vmem:[#allocation5 + $0x50] sm:$0xf]
    %v150 = vld [vmem:[#allocation5 + $0x54] sm:$0xff]
    %v151 = vld [vmem:[#allocation5 + $0x5c] sm:$0xf]
    %v152 = vld [vmem:[#allocation5 + $0x60] sm:$0xff]
    %v153 = vld [vmem:[#allocation5 + $0x68] sm:$0xf]
    %v154 = vld [vmem:[#allocation5 + $0x6c] sm:$0xff]
    %v155 = vld [vmem:[#allocation5 + $0x74] sm:$0xf]
    %v156 = vld [vmem:[#allocation5 + $0x78] sm:$0xff]
    %v157 = vld [vmem:[#allocation5 + $0x80] sm:$0xf]
    %v158 = vld [vmem:[#allocation5 + $0x84] sm:$0xff]
    %v159 = vld [vmem:[#allocation5 + $0x8c] sm:$0xf]
    %v160 = vld [vmem:[#allocation5 + $0x90] sm:$0xff]
    %v161 = vld [vmem:[#allocation5 + $0x98] sm:$0xf]
    %v162 = vld [vmem:[#allocation5 + $0x9c] sm:$0xff]
    %v163 = vld [vmem:[#allocation5 + $0xa4] sm:$0xf]
    %v164 = vld [vmem:[#allocation5 + $0xa8] sm:$0xff]
    %v165 = vld [vmem:[#allocation5 + $0xb0] sm:$0xf]
    %v166 = vld [vmem:[#allocation5 + $0xb4] sm:$0xff]
    %v167 = vld [vmem:[#allocation5 + $0xbc] sm:$0xf]
    %v200 = vunpack.c.l.b16 %v136
    %v201 = vunpack.c.h.b16 %v136
    %v202 = vunpack.c.l.b16 %v137
    %v203 = vunpack.c.l.b16 %v138
    %v204 = vunpack.c.h.b16 %v138
    %v205 = vunpack.c.l.b16 %v139
    %v206 = vunpack.c.l.b16 %v140
    %v207 = vunpack.c.h.b16 %v140
    %v208 = vunpack.c.l.b16 %v141
    %v209 = vunpack.c.l.b16 %v142
    %v210 = vunpack.c.h.b16 %v142
    %v211 = vunpack.c.l.b16 %v143
    %v212 = vunpack.c.l.b16 %v144
    %v213 = vunpack.c.h.b16 %v144
    %v214 = vunpack.c.l.b16 %v145
    %v215 = vunpack.c.l.b16 %v146
    %v216 = vunpack.c.h.b16 %v146
    %v217 = vunpack.c.l.b16 %v147
    %v218 = vunpack.c.l.b16 %v148
    %v219 = vunpack.c.h.b16 %v148
    %v220 = vunpack.c.l.b16 %v149
    %v221 = vunpack.c.l.b16 %v150
    %v222 = vunpack.c.h.b16 %v150
    %v223 = vunpack.c.l.b16 %v151
    %v224 = vunpack.c.l.b16 %v152
    %v225 = vunpack.c.h.b16 %v152
    %v226 = vunpack.c.l.b16 %v153
    %v227 = vunpack.c.l.b16 %v154
    %v228 = vunpack.c.h.b16 %v154
    %v229 = vunpack.c.l.b16 %v155
    %v230 = vunpack.c.l.b16 %v156
    %v231 = vunpack.c.h.b16 %v156
    %v232 = vunpack.c.l.b16 %v157
    %v233 = vunpack.c.l.b16 %v158
    %v234 = vunpack.c.h.b16 %v158
    %v235 = vunpack.c.l.b16 %v159
    %v236 = vunpack.c.l.b16 %v160
    %v237 = vunpack.c.h.b16 %v160
    %v238 = vunpack.c.l.b16 %v161
    %v239 = vunpack.c.l.b16 %v162
    %v240 = vunpack.c.h.b16 %v162
    %v241 = vunpack.c.l.b16 %v163
    %v242 = vunpack.c.l.b16 %v164
    %v243 = vunpack.c.h.b16 %v164
    %v244 = vunpack.c.l.b16 %v165
    %v245 = vunpack.c.l.b16 %v166
    %v246 = vunpack.c.h.b16 %v166
    %v247 = vunpack.c.l.b16 %v167
    %v248 = vpack.c.b16 %v203, %v200
    %v249 = vpack.c.b16 %v204, %v201
    %v250 = vpack.c.b16 %v205, %v202
    %v251 = vpack.c.b16 %v209, %v206
    %v252 = vpack.c.b16 %v210, %v207
    %v253 = vpack.c.b16 %v211, %v208
    %v254 = vpack.c.b16 %v215, %v212
    %v255 = vpack.c.b16 %v216, %v213
    %v256 = vpack.c.b16 %v217, %v214
    %v257 = vpack.c.b16 %v221, %v218
    %v258 = vpack.c.b16 %v222, %v219
    %v259 = vpack.c.b16 %v223, %v220
    %v260 = vpack.c.b16 %v227, %v224
    %v261 = vpack.c.b16 %v228, %v225
    %v262 = vpack.c.b16 %v229, %v226
    %v263 = vpack.c.b16 %v233, %v230
    %v264 = vpack.c.b16 %v234, %v231
    %v265 = vpack.c.b16 %v235, %v232
    %v266 = vpack.c.b16 %v239, %v236
    %v267 = vpack.c.b16 %v240, %v237
    %v268 = vpack.c.b16 %v241, %v238
    %v269 = vpack.c.b16 %v245, %v242
    %v270 = vpack.c.b16 %v246, %v243
    %v271 = vpack.c.b16 %v247, %v244
    %296 = vmatprep.subr.bf16.mxu0 %v249
    %297 = vmatpush1.bf16.msra.mxu0 %v248
    %298 = vmatprep.subr.bf16.mxu0 %v252
    %299 = vmatpush1.bf16.msra.mxu0 %v251
    %300 = vmatprep.subr.bf16.mxu0 %v255
    %301 = vmatpush1.bf16.msra.mxu0 %v254
    %302 = vmatprep.subr.bf16.mxu0 %v258
    %303 = vmatpush1.bf16.msra.mxu0 %v257
    %304 = vmatprep.subr.bf16.mxu0 %v261
    %305 = vmatpush1.bf16.msra.mxu0 %v260
    %306 = vmatprep.subr.bf16.mxu0 %v264
    %307 = vmatpush1.bf16.msra.mxu0 %v263
    %308 = vmatprep.subr.bf16.mxu0 %v267
    %309 = vmatpush1.bf16.msra.mxu0 %v266
    %310 = vmatprep.subr.bf16.mxu0 %v270
    %311 = vmatpush1.bf16.msra.mxu0 %v269
    %312 = vmatprep.subr.bf16.mxu0 0
    %313 = vmatpush1.bf16.msra.mxu0 0
    %314 = vmatprep.subr.bf16.mxu0 0
    %315 = vmatpush1.bf16.msra.mxu0 0
    %316 = vmatprep.subr.bf16.mxu0 0
    %317 = vmatpush1.bf16.msra.mxu0 0
    %318 = vmatprep.subr.bf16.mxu0 0
    %319 = vmatpush1.bf16.msra.mxu0 0
    %320 = vmatprep.subr.bf16.mxu0 0
    %321 = vmatpush1.bf16.msra.mxu0 0
    %322 = vmatprep.subr.bf16.mxu0 0
    %323 = vmatpush1.bf16.msra.mxu0 0
    %324 = vmatprep.subr.bf16.mxu0 0
    %325 = vmatpush1.bf16.msra.mxu0 0
    %326 = vmatprep.subr.bf16.mxu0 0
    %327 = vmatpush1.bf16.msra.mxu0 0
    %328 = vmatprep.mubr.bf16.mxu0 0
    %329 = vmatmul.mubr.bf16.gmra.mrb[0].mxu0 %v135
    %v330 = vpop.f32.mrb[0].mxu0
    %v331 = vadd.f32 0.0, %v330
    %v332 = vpop.f32.mrb[0].mxu0
    %v333 = vadd.f32 0.0, %v332
    %v334 = vpop.f32.mrb[0].mxu0
    %v335 = vadd.f32 0.0, %v334
    %v336 = vpop.f32.mrb[0].mxu0
    %v337 = vadd.f32 0.0, %v336
    %338 = vdwg.mxu0
    %339 = vmatprep.subr.bf16.mxu0 0
    %340 = vmatpush1.bf16.msra.mxu0 %v250
    %341 = vmatprep.subr.bf16.mxu0 0
    %342 = vmatpush1.bf16.msra.mxu0 %v253
    %343 = vmatprep.subr.bf16.mxu0 0
    %344 = vmatpush1.bf16.msra.mxu0 %v256
    %345 = vmatprep.subr.bf16.mxu0 0
    %346 = vmatpush1.bf16.msra.mxu0 %v259
    %347 = vmatprep.subr.bf16.mxu0 0
    %348 = vmatpush1.bf16.msra.mxu0 %v262
    %349 = vmatprep.subr.bf16.mxu0 0
    %350 = vmatpush1.bf16.msra.mxu0 %v265
    %351 = vmatprep.subr.bf16.mxu0 0
    %352 = vmatpush1.bf16.msra.mxu0 %v268
    %353 = vmatprep.subr.bf16.mxu0 0
    %354 = vmatpush1.bf16.msra.mxu0 %v271
    %355 = vmatprep.subr.bf16.mxu0 0
    %356 = vmatpush1.bf16.msra.mxu0 0
    %357 = vmatprep.subr.bf16.mxu0 0
    %358 = vmatpush1.bf16.msra.mxu0 0
    %359 = vmatprep.subr.bf16.mxu0 0
    %360 = vmatpush1.bf16.msra.mxu0 0
    %361 = vmatprep.subr.bf16.mxu0 0
    %362 = vmatpush1.bf16.msra.mxu0 0
    %363 = vmatprep.subr.bf16.mxu0 0
    %364 = vmatpush1.bf16.msra.mxu0 0
    %365 = vmatprep.subr.bf16.mxu0 0
    %366 = vmatpush1.bf16.msra.mxu0 0
    %367 = vmatprep.subr.bf16.mxu0 0
    %368 = vmatpush1.bf16.msra.mxu0 0
    %369 = vmatprep.subr.bf16.mxu0 0
    %370 = vmatpush1.bf16.msra.mxu0 0
    %371 = vmatprep.mubr.bf16.mxu0 0
    %372 = vmatmul.mubr.bf16.gmra.mrb[0].mxu0 %v135
    %v373 = vpop.f32.mrb[0].mxu0
    %v374 = vadd.f32 0.0, %v373
    %v375 = vpop.f32.mrb[0].mxu0
    %v376 = vpop.f32.mrb[0].mxu0
    %v377 = vadd.f32 0.0, %v376
    %v378 = vpop.f32.mrb[0].mxu0
    %379 = vdwg.mxu0
    %v380 = vlaneseq
    %v381 = vshrl.u32 %v380, 7
    %v382 = vsub.s32 0, %v381
    %v383 = vrot.slane %v98, %v382
    %v384 = vadd.f32 %v331, %v383
    %v385 = vadd.f32 %v335, %v383
    %v386 = vmul.f32 %v384, 0.17677669
    %v387 = vmul.f32 %v385, 0.17677669
    %v388 = vlaneseq
    %v389 = vshrl.u32 %v388, 7
    %v390 = vsub.s32 1, %v389
    %v391 = vrot.slane %v98, %v390
    %v392 = vadd.f32 %v333, %v391
    %v393 = vadd.f32 %v337, %v391
    %v394 = vlaneseq
    %v395 = vshrl.u32 %v394, 7
    %v396 = vsub.s32 2, %v395
    %v397 = vrot.slane %v98, %v396
    %v398 = vadd.f32 %v374, %v397
    %v399 = vadd.f32 %v377, %v397
    %v400 = vld [vmem:[#allocation7] sm:$0xf]
    %v401 = vld [vmem:[#allocation7 + $0x4] sm:$0xf]
    %v402 = vld [vmem:[#allocation7 + $0x8] sm:$0xf]
    %v403 = vld [vmem:[#allocation7 + $0xc] sm:$0xf]
    %v404 = vld [vmem:[#allocation7 + $0x10] sm:$0xf]
    %v405 = vld [vmem:[#allocation7 + $0x14] sm:$0xf]
    %v406 = vld [vmem:[#allocation7 + $0x18] sm:$0xf]
    %v407 = vld [vmem:[#allocation7 + $0x1c] sm:$0xf]
    %v408 = vld [vmem:[#allocation7 + $0x20] sm:$0xf]
    %v409 = vld [vmem:[#allocation7 + $0x24] sm:$0xf]
    %v410 = vld [vmem:[#allocation7 + $0x28] sm:$0xf]
    %v411 = vld [vmem:[#allocation7 + $0x2c] sm:$0xf]
    %v412 = vld [vmem:[#allocation7 + $0x30] sm:$0xf]
    %v413 = vld [vmem:[#allocation7 + $0x34] sm:$0xf]
    %v414 = vld [vmem:[#allocation7 + $0x38] sm:$0xf]
    %v415 = vld [vmem:[#allocation7 + $0x3c] sm:$0xf]
    %416 = vxpose.xlu0.b32.start [1/16] %v392, 128
    %417 = vxpose.xlu0.b32.cont [2/16] 0.0, 128
    %418 = vxpose.xlu0.b32.cont [3/16] 0.0, 128
    %419 = vxpose.xlu0.b32.cont [4/16] 0.0, 128
    %420 = vxpose.xlu0.b32.cont [5/16] 0.0, 128
    %421 = vxpose.xlu0.b32.cont [6/16] 0.0, 128
    %422 = vxpose.xlu0.b32.cont [7/16] 0.0, 128
    %423 = vxpose.xlu0.b32.cont [8/16] 0.0, 128
    %424 = vxpose.xlu0.b32.cont [9/16] 0.0, 128
    %425 = vxpose.xlu0.b32.cont [10/16] 0.0, 128
    %426 = vxpose.xlu0.b32.cont [11/16] 0.0, 128
    %427 = vxpose.xlu0.b32.cont [12/16] 0.0, 128
    %428 = vxpose.xlu0.b32.cont [13/16] 0.0, 128
    %429 = vxpose.xlu0.b32.cont [14/16] 0.0, 128
    %430 = vxpose.xlu0.b32.cont [15/16] 0.0, 128
    %431 = vxpose.xlu0.b32.end [16/16] 0.0, 128
    %v432 = vpop.trf.xlu0
    %v433 = vpop.trf.xlu0
    %v434 = vpop.trf.xlu0
    %v435 = vpop.trf.xlu0
    %v436 = vpop.trf.xlu0
    %v437 = vpop.trf.xlu0
    %v438 = vpop.trf.xlu0
    %v439 = vpop.trf.xlu0
    %v440 = vpop.trf.xlu0
    %v441 = vpop.trf.xlu0
    %v442 = vpop.trf.xlu0
    %v443 = vpop.trf.xlu0
    %v444 = vpop.trf.xlu0
    %v445 = vpop.trf.xlu0
    %v446 = vpop.trf.xlu0
    %v447 = vpop.trf.xlu0
    %v448 = vpack.c.bf16 %v398, %v398
    %v449 = vpack.c.bf16 %v386, %v386
    %v450 = vpack.c.bf16 %v433, %v432
    %v451 = vpack.c.bf16 %v435, %v434
    %vm452 = vcmask 261120
    %v454 = vsel %vm452, %v449, 0
    %456 = vmatprep.subr.bf16.mxu0 0
    %457 = vmatpush1.bf16.msra.mxu0 %v450
    %458 = vmatprep.subr.bf16.mxu0 0
    %459 = vmatpush1.bf16.msra.mxu0 %v451
    %460 = vmatprep.subr.bf16.mxu0 0
    %461 = vmatpush1.bf16.msra.mxu0 0
    %462 = vmatprep.subr.bf16.mxu0 0
    %463 = vmatpush1.bf16.msra.mxu0 0
    %464 = vmatprep.subr.bf16.mxu0 0
    %465 = vmatpush1.bf16.msra.mxu0 0
    %466 = vmatprep.subr.bf16.mxu0 0
    %467 = vmatpush1.bf16.msra.mxu0 0
    %468 = vmatprep.subr.bf16.mxu0 0
    %469 = vmatpush1.bf16.msra.mxu0 0
    %470 = vmatprep.subr.bf16.mxu0 0
    %471 = vmatpush1.bf16.msra.mxu0 0
    %472 = vmatprep.subr.bf16.mxu0 0
    %473 = vmatpush1.bf16.msra.mxu0 0
    %474 = vmatprep.subr.bf16.mxu0 0
    %475 = vmatpush1.bf16.msra.mxu0 0
    %476 = vmatprep.subr.bf16.mxu0 0
    %477 = vmatpush1.bf16.msra.mxu0 0
    %478 = vmatprep.subr.bf16.mxu0 0
    %479 = vmatpush1.bf16.msra.mxu0 0
    %480 = vmatprep.subr.bf16.mxu0 0
    %481 = vmatpush1.bf16.msra.mxu0 0
    %482 = vmatprep.subr.bf16.mxu0 0
    %483 = vmatpush1.bf16.msra.mxu0 0
    %484 = vmatprep.subr.bf16.mxu0 0
    %485 = vmatpush1.bf16.msra.mxu0 0
    %486 = vmatprep.subr.bf16.mxu0 0
    %487 = vmatpush1.bf16.msra.mxu0 0
    %488 = vmatprep.mubr.bf16.mxu0 0
    %489 = vmatmul.mubr.bf16.gmra.mrb[0].mxu0 %v454
    %v490 = vpop.f32.mrb[0].mxu0
    %v491 = vadd.f32 0.0, %v490
    %v492 = vpop.f32.mrb[0].mxu0
    %v493 = vpop.f32.mrb[0].mxu0
    %v494 = vpop.f32.mrb[0].mxu0
    %495 = vdwg.mxu0
    %vm496 = vcmask 64512
    %v497 = vsel %vm496, %v491, -inf
    %498 = vmax.xlane.f32.xlu0 %v497
    %v499 = vpop.xlane.xlu0 %498
    %v500 = vsub.f32 %v491, %v499
    %v501 = vmul.f32 %v500, 1.442695
    %v502 = vpow.pop %v501
    %v503 = vpack.c.bf16 %v502, %v502
    %v505 = vsel %vm496, %v503, 0
    %vm507 = vcmask 1043456
    %v509 = vsel %vm507, %v448, 0
    %511 = vmatprep.subr.bf16.mxu0 0
    %512 = vmatpush1.bf16.msra.mxu0 %v509
    %513 = vmatprep.subr.bf16.mxu0 0
    %514 = vmatpush1.bf16.msra.mxu0 0
    %515 = vmatprep.subr.bf16.mxu0 0
    %516 = vmatpush1.bf16.msra.mxu0 0
    %517 = vmatprep.subr.bf16.mxu0 0
    %518 = vmatpush1.bf16.msra.mxu0 0
    %519 = vmatprep.subr.bf16.mxu0 0
    %520 = vmatpush1.bf16.msra.mxu0 0
    %521 = vmatprep.subr.bf16.mxu0 0
    %522 = vmatpush1.bf16.msra.mxu0 0
    %523 = vmatprep.subr.bf16.mxu0 0
    %524 = vmatpush1.bf16.msra.mxu0 0
    %525 = vmatprep.subr.bf16.mxu0 0
    %526 = vmatpush1.bf16.msra.mxu0 0
    %527 = vmatprep.subr.bf16.mxu0 0
    %528 = vmatpush1.bf16.msra.mxu0 0
    %529 = vmatprep.subr.bf16.mxu0 0
    %530 = vmatpush1.bf16.msra.mxu0 0
    %531 = vmatprep.subr.bf16.mxu0 0
    %532 = vmatpush1.bf16.msra.mxu0 0
    %533 = vmatprep.subr.bf16.mxu0 0
    %534 = vmatpush1.bf16.msra.mxu0 0
    %535 = vmatprep.subr.bf16.mxu0 0
    %536 = vmatpush1.bf16.msra.mxu0 0
    %537 = vmatprep.subr.bf16.mxu0 0
    %538 = vmatpush1.bf16.msra.mxu0 0
    %539 = vmatprep.subr.bf16.mxu0 0
    %540 = vmatpush1.bf16.msra.mxu0 0
    %541 = vmatprep.subr.bf16.mxu0 0
    %542 = vmatpush1.bf16.msra.mxu0 0
    %543 = vmatprep.mubr.bf16.mxu0 0
    %544 = vmatmul.mubr.bf16.gmra.mrb[0].mxu0 %v505
    %v545 = vpop.f32.mrb[0].mxu0
    %v546 = vadd.f32 0.0, %v545
    %v547 = vpop.f32.mrb[0].mxu0
    %v548 = vpop.f32.mrb[0].mxu0
    %v549 = vpop.f32.mrb[0].mxu0
    %550 = vdwg.mxu0
    %v551 = vsel %vm496, %v502, 0.0
    %552 = vadd.xlane.f32.xlu0 %v551
    %v553 = vpop.xlane.xlu0 %552
    %v554 = vrcp.pop %v553
    %v555 = vmul.f32 %v546, %v554
    %v556 = vpack.c.bf16 %v555, %v555
    %v557 = vpack.c.bf16 %v437, %v436
    %v558 = vpack.c.bf16 %v439, %v438
    %560 = vrot.lane.b32.xlu0 %v449, 96
    %v561 = vpop.permute.xlu0 %560
    %v563 = vsel %vm452, %v561, 0
    %565 = vmatprep.subr.bf16.mxu0 0
    %566 = vmatpush1.bf16.msra.mxu0 %v557
    %567 = vmatprep.subr.bf16.mxu0 0
    %568 = vmatpush1.bf16.msra.mxu0 %v558
    %569 = vmatprep.subr.bf16.mxu0 0
    %570 = vmatpush1.bf16.msra.mxu0 0
    %571 = vmatprep.subr.bf16.mxu0 0
    %572 = vmatpush1.bf16.msra.mxu0 0
    %573 = vmatprep.subr.bf16.mxu0 0
    %574 = vmatpush1.bf16.msra.mxu0 0
    %575 = vmatprep.subr.bf16.mxu0 0
    %576 = vmatpush1.bf16.msra.mxu0 0
    %577 = vmatprep.subr.bf16.mxu0 0
    %578 = vmatpush1.bf16.msra.mxu0 0
    %579 = vmatprep.subr.bf16.mxu0 0
    %580 = vmatpush1.bf16.msra.mxu0 0
    %581 = vmatprep.subr.bf16.mxu0 0
    %582 = vmatpush1.bf16.msra.mxu0 0
    %583 = vmatprep.subr.bf16.mxu0 0
    %584 = vmatpush1.bf16.msra.mxu0 0
    %585 = vmatprep.subr.bf16.mxu0 0
    %586 = vmatpush1.bf16.msra.mxu0 0
    %587 = vmatprep.subr.bf16.mxu0 0
    %588 = vmatpush1.bf16.msra.mxu0 0
    %589 = vmatprep.subr.bf16.mxu0 0
    %590 = vmatpush1.bf16.msra.mxu0 0
    %591 = vmatprep.subr.bf16.mxu0 0
    %592 = vmatpush1.bf16.msra.mxu0 0
    %593 = vmatprep.subr.bf16.mxu0 0
    %594 = vmatpush1.bf16.msra.mxu0 0
    %595 = vmatprep.subr.bf16.mxu0 0
    %596 = vmatpush1.bf16.msra.mxu0 0
    %597 = vmatprep.mubr.bf16.mxu0 0
    %598 = vmatmul.mubr.bf16.gmra.mrb[0].mxu0 %v563
    %v599 = vpop.f32.mrb[0].mxu0
    %v600 = vadd.f32 0.0, %v599
    %v601 = vpop.f32.mrb[0].mxu0
    %v602 = vpop.f32.mrb[0].mxu0
    %v603 = vpop.f32.mrb[0].mxu0
    %604 = vdwg.mxu0
    %v605 = vsel %vm496, %v600, -inf
    %606 = vmax.xlane.f32.xlu0 %v605
    %v607 = vpop.xlane.xlu0 %606
    %v608 = vsub.f32 %v600, %v607
    %v609 = vmul.f32 %v608, 1.442695
    %v610 = vpow.pop %v609
    %v611 = vpack.c.bf16 %v610, %v610
    %613 = vrot.lane.b32.xlu0 %v448, 96
    %v614 = vpop.permute.xlu0 %613
    %v616 = vsel %vm496, %v611, 0
    %v619 = vsel %vm507, %v614, 0
    %621 = vmatprep.subr.bf16.mxu0 0
    %622 = vmatpush1.bf16.msra.mxu0 %v619
    %623 = vmatprep.subr.bf16.mxu0 0
    %624 = vmatpush1.bf16.msra.mxu0 0
    %625 = vmatprep.subr.bf16.mxu0 0
    %626 = vmatpush1.bf16.msra.mxu0 0
    %627 = vmatprep.subr.bf16.mxu0 0
    %628 = vmatpush1.bf16.msra.mxu0 0
    %629 = vmatprep.subr.bf16.mxu0 0
    %630 = vmatpush1.bf16.msra.mxu0 0
    %631 = vmatprep.subr.bf16.mxu0 0
    %632 = vmatpush1.bf16.msra.mxu0 0
    %633 = vmatprep.subr.bf16.mxu0 0
    %634 = vmatpush1.bf16.msra.mxu0 0
    %635 = vmatprep.subr.bf16.mxu0 0
    %636 = vmatpush1.bf16.msra.mxu0 0
    %637 = vmatprep.subr.bf16.mxu0 0
    %638 = vmatpush1.bf16.msra.mxu0 0
    %639 = vmatprep.subr.bf16.mxu0 0
    %640 = vmatpush1.bf16.msra.mxu0 0
    %641 = vmatprep.subr.bf16.mxu0 0
    %642 = vmatpush1.bf16.msra.mxu0 0
    %643 = vmatprep.subr.bf16.mxu0 0
    %644 = vmatpush1.bf16.msra.mxu0 0
    %645 = vmatprep.subr.bf16.mxu0 0
    %646 = vmatpush1.bf16.msra.mxu0 0
    %647 = vmatprep.subr.bf16.mxu0 0
    %648 = vmatpush1.bf16.msra.mxu0 0
    %649 = vmatprep.subr.bf16.mxu0 0
    %650 = vmatpush1.bf16.msra.mxu0 0
    %651 = vmatprep.subr.bf16.mxu0 0
    %652 = vmatpush1.bf16.msra.mxu0 0
    %653 = vmatprep.mubr.bf16.mxu0 0
    %654 = vmatmul.mubr.bf16.gmra.mrb[0].mxu0 %v616
    %v655 = vpop.f32.mrb[0].mxu0
    %v656 = vadd.f32 0.0, %v655
    %v657 = vpop.f32.mrb[0].mxu0
    %v658 = vpop.f32.mrb[0].mxu0
    %v659 = vpop.f32.mrb[0].mxu0
    %660 = vdwg.mxu0
    %v661 = vsel %vm496, %v610, 0.0
    %662 = vadd.xlane.f32.xlu0 %v661
    %v663 = vpop.xlane.xlu0 %662
    %v664 = vrcp.pop %v663
    %v665 = vmul.f32 %v656, %v664
    %v666 = vpack.c.bf16 %v665, %v665
    %v671 = vunpack.c.l.b16 %v404
    %v672 = vunpack.c.l.b16 %v405
    %v673 = vunpack.c.l.b16 %v406
    %v674 = vunpack.c.l.b16 %v407
    %v675 = vpack.c.b16 %v672, %v671
    %v676 = vpack.c.b16 %v674, %v673
    %v680 = vsel %vm452, %v666, 0
    %682 = vmatprep.subr.bf16.mxu0 0
    %683 = vmatpush1.bf16.msra.mxu0 %v675
    %684 = vmatprep.subr.bf16.mxu0 0
    %685 = vmatpush1.bf16.msra.mxu0 %v676
    %686 = vmatprep.subr.bf16.mxu0 0
    %687 = vmatpush1.bf16.msra.mxu0 0
    %688 = vmatprep.subr.bf16.mxu0 0
    %689 = vmatpush1.bf16.msra.mxu0 0
    %690 = vmatprep.subr.bf16.mxu0 0
    %691 = vmatpush1.bf16.msra.mxu0 0
    %692 = vmatprep.subr.bf16.mxu0 0
    %693 = vmatpush1.bf16.msra.mxu0 0
    %694 = vmatprep.subr.bf16.mxu0 0
    %695 = vmatpush1.bf16.msra.mxu0 0
    %696 = vmatprep.subr.bf16.mxu0 0
    %697 = vmatpush1.bf16.msra.mxu0 0
    %698 = vmatprep.subr.bf16.mxu0 0
    %699 = vmatpush1.bf16.msra.mxu0 0
    %700 = vmatprep.subr.bf16.mxu0 0
    %701 = vmatpush1.bf16.msra.mxu0 0
    %702 = vmatprep.subr.bf16.mxu0 0
    %703 = vmatpush1.bf16.msra.mxu0 0
    %704 = vmatprep.subr.bf16.mxu0 0
    %705 = vmatpush1.bf16.msra.mxu0 0
    %706 = vmatprep.subr.bf16.mxu0 0
    %707 = vmatpush1.bf16.msra.mxu0 0
    %708 = vmatprep.subr.bf16.mxu0 0
    %709 = vmatpush1.bf16.msra.mxu0 0
    %710 = vmatprep.subr.bf16.mxu0 0
    %711 = vmatpush1.bf16.msra.mxu0 0
    %712 = vmatprep.subr.bf16.mxu0 0
    %713 = vmatpush1.bf16.msra.mxu0 0
    %714 = vmatprep.mubr.bf16.mxu0 0
    %715 = vmatmul.mubr.bf16.gmra.mrb[0].mxu0 %v680
    %v716 = vpop.f32.mrb[0].mxu0
    %v717 = vadd.f32 0.0, %v716
    %v718 = vpop.f32.mrb[0].mxu0
    %v719 = vpop.f32.mrb[0].mxu0
    %v720 = vpop.f32.mrb[0].mxu0
    %721 = vdwg.mxu0
    %v726 = vunpack.c.l.b16 %v400
    %v727 = vunpack.c.l.b16 %v401
    %v728 = vunpack.c.l.b16 %v402
    %v729 = vunpack.c.l.b16 %v403
    %v730 = vpack.c.b16 %v727, %v726
    %v731 = vpack.c.b16 %v729, %v728
    %v735 = vsel %vm452, %v556, 0
    %737 = vmatprep.subr.bf16.mxu0 0
    %738 = vmatpush1.bf16.msra.mxu0 %v730
    %739 = vmatprep.subr.bf16.mxu0 0
    %740 = vmatpush1.bf16.msra.mxu0 %v731
    %741 = vmatprep.subr.bf16.mxu0 0
    %742 = vmatpush1.bf16.msra.mxu0 0
    %743 = vmatprep.subr.bf16.mxu0 0
    %744 = vmatpush1.bf16.msra.mxu0 0
    %745 = vmatprep.subr.bf16.mxu0 0
    %746 = vmatpush1.bf16.msra.mxu0 0
    %747 = vmatprep.subr.bf16.mxu0 0
    %748 = vmatpush1.bf16.msra.mxu0 0
    %749 = vmatprep.subr.bf16.mxu0 0
    %750 = vmatpush1.bf16.msra.mxu0 0
    %751 = vmatprep.subr.bf16.mxu0 0
    %752 = vmatpush1.bf16.msra.mxu0 0
    %753 = vmatprep.subr.bf16.mxu0 0
    %754 = vmatpush1.bf16.msra.mxu0 0
    %755 = vmatprep.subr.bf16.mxu0 0
    %756 = vmatpush1.bf16.msra.mxu0 0
    %757 = vmatprep.subr.bf16.mxu0 0
    %758 = vmatpush1.bf16.msra.mxu0 0
    %759 = vmatprep.subr.bf16.mxu0 0
    %760 = vmatpush1.bf16.msra.mxu0 0
    %761 = vmatprep.subr.bf16.mxu0 0
    %762 = vmatpush1.bf16.msra.mxu0 0
    %763 = vmatprep.subr.bf16.mxu0 0
    %764 = vmatpush1.bf16.msra.mxu0 0
    %765 = vmatprep.subr.bf16.mxu0 0
    %766 = vmatpush1.bf16.msra.mxu0 0
    %767 = vmatprep.subr.bf16.mxu0 0
    %768 = vmatpush1.bf16.msra.mxu0 0
    %769 = vmatprep.mubr.bf16.mxu0 0
    %770 = vmatmul.mubr.bf16.gmra.mrb[0].mxu0 %v735
    %v771 = vpop.f32.mrb[0].mxu0
    %v772 = vadd.f32 %v717, %v771
    %v773 = vpop.f32.mrb[0].mxu0
    %v774 = vpop.f32.mrb[0].mxu0
    %v775 = vpop.f32.mrb[0].mxu0
    %776 = vdwg.mxu0
    %v777 = vpack.c.bf16 %v441, %v440
    %v778 = vpack.c.bf16 %v443, %v442
    %779 = vrot.lane.b32.xlu0 %v449, 64
    %v780 = vpop.permute.xlu0 %779
    %v782 = vsel %vm452, %v780, 0
    %784 = vmatprep.subr.bf16.mxu0 0
    %785 = vmatpush1.bf16.msra.mxu0 %v777
    %786 = vmatprep.subr.bf16.mxu0 0
    %787 = vmatpush1.bf16.msra.mxu0 %v778
    %788 = vmatprep.subr.bf16.mxu0 0
    %789 = vmatpush1.bf16.msra.mxu0 0
    %790 = vmatprep.subr.bf16.mxu0 0
    %791 = vmatpush1.bf16.msra.mxu0 0
    %792 = vmatprep.subr.bf16.mxu0 0
    %793 = vmatpush1.bf16.msra.mxu0 0
    %794 = vmatprep.subr.bf16.mxu0 0
    %795 = vmatpush1.bf16.msra.mxu0 0
    %796 = vmatprep.subr.bf16.mxu0 0
    %797 = vmatpush1.bf16.msra.mxu0 0
    %798 = vmatprep.subr.bf16.mxu0 0
    %799 = vmatpush1.bf16.msra.mxu0 0
    %800 = vmatprep.subr.bf16.mxu0 0
    %801 = vmatpush1.bf16.msra.mxu0 0
    %802 = vmatprep.subr.bf16.mxu0 0
    %803 = vmatpush1.bf16.msra.mxu0 0
    %804 = vmatprep.subr.bf16.mxu0 0
    %805 = vmatpush1.bf16.msra.mxu0 0
    %806 = vmatprep.subr.bf16.mxu0 0
    %807 = vmatpush1.bf16.msra.mxu0 0
    %808 = vmatprep.subr.bf16.mxu0 0
    %809 = vmatpush1.bf16.msra.mxu0 0
    %810 = vmatprep.subr.bf16.mxu0 0
    %811 = vmatpush1.bf16.msra.mxu0 0
    %812 = vmatprep.subr.bf16.mxu0 0
    %813 = vmatpush1.bf16.msra.mxu0 0
    %814 = vmatprep.subr.bf16.mxu0 0
    %815 = vmatpush1.bf16.msra.mxu0 0
    %816 = vmatprep.mubr.bf16.mxu0 0
    %817 = vmatmul.mubr.bf16.gmra.mrb[0].mxu0 %v782
    %v818 = vpop.f32.mrb[0].mxu0
    %v819 = vadd.f32 0.0, %v818
    %v820 = vpop.f32.mrb[0].mxu0
    %v821 = vpop.f32.mrb[0].mxu0
    %v822 = vpop.f32.mrb[0].mxu0
    %823 = vdwg.mxu0
    %v824 = vsel %vm496, %v819, -inf
    %825 = vmax.xlane.f32.xlu0 %v824
    %v826 = vpop.xlane.xlu0 %825
    %v827 = vsub.f32 %v819, %v826
    %v828 = vmul.f32 %v827, 1.442695
    %v829 = vpow.pop %v828
    %v830 = vpack.c.bf16 %v829, %v829
    %831 = vrot.lane.b32.xlu0 %v448, 64
    %v832 = vpop.permute.xlu0 %831
    %v834 = vsel %vm496, %v830, 0
    %v837 = vsel %vm507, %v832, 0
    %839 = vmatprep.subr.bf16.mxu0 0
    %840 = vmatpush1.bf16.msra.mxu0 %v837
    %841 = vmatprep.subr.bf16.mxu0 0
    %842 = vmatpush1.bf16.msra.mxu0 0
    %843 = vmatprep.subr.bf16.mxu0 0
    %844 = vmatpush1.bf16.msra.mxu0 0
    %845 = vmatprep.subr.bf16.mxu0 0
    %846 = vmatpush1.bf16.msra.mxu0 0
    %847 = vmatprep.subr.bf16.mxu0 0
    %848 = vmatpush1.bf16.msra.mxu0 0
    %849 = vmatprep.subr.bf16.mxu0 0
    %850 = vmatpush1.bf16.msra.mxu0 0
    %851 = vmatprep.subr.bf16.mxu0 0
    %852 = vmatpush1.bf16.msra.mxu0 0
    %853 = vmatprep.subr.bf16.mxu0 0
    %854 = vmatpush1.bf16.msra.mxu0 0
    %855 = vmatprep.subr.bf16.mxu0 0
    %856 = vmatpush1.bf16.msra.mxu0 0
    %857 = vmatprep.subr.bf16.mxu0 0
    %858 = vmatpush1.bf16.msra.mxu0 0
    %859 = vmatprep.subr.bf16.mxu0 0
    %860 = vmatpush1.bf16.msra.mxu0 0
    %861 = vmatprep.subr.bf16.mxu0 0
    %862 = vmatpush1.bf16.msra.mxu0 0
    %863 = vmatprep.subr.bf16.mxu0 0
    %864 = vmatpush1.bf16.msra.mxu0 0
    %865 = vmatprep.subr.bf16.mxu0 0
    %866 = vmatpush1.bf16.msra.mxu0 0
    %867 = vmatprep.subr.bf16.mxu0 0
    %868 = vmatpush1.bf16.msra.mxu0 0
    %869 = vmatprep.subr.bf16.mxu0 0
    %870 = vmatpush1.bf16.msra.mxu0 0
    %871 = vmatprep.mubr.bf16.mxu0 0
    %872 = vmatmul.mubr.bf16.gmra.mrb[0].mxu0 %v834
    %v873 = vpop.f32.mrb[0].mxu0
    %v874 = vadd.f32 0.0, %v873
    %v875 = vpop.f32.mrb[0].mxu0
    %v876 = vpop.f32.mrb[0].mxu0
    %v877 = vpop.f32.mrb[0].mxu0
    %878 = vdwg.mxu0
    %v879 = vsel %vm496, %v829, 0.0
    %880 = vadd.xlane.f32.xlu0 %v879
    %v881 = vpop.xlane.xlu0 %880
    %v882 = vrcp.pop %v881
    %v883 = vmul.f32 %v874, %v882
    %v884 = vpack.c.bf16 %v883, %v883
    %v889 = vunpack.c.l.b16 %v408
    %v890 = vunpack.c.l.b16 %v409
    %v891 = vunpack.c.l.b16 %v410
    %v892 = vunpack.c.l.b16 %v411
    %v893 = vpack.c.b16 %v890, %v889
    %v894 = vpack.c.b16 %v892, %v891
    %v898 = vsel %vm452, %v884, 0
    %900 = vmatprep.subr.bf16.mxu0 0
    %901 = vmatpush1.bf16.msra.mxu0 %v893
    %902 = vmatprep.subr.bf16.mxu0 0
    %903 = vmatpush1.bf16.msra.mxu0 %v894
    %904 = vmatprep.subr.bf16.mxu0 0
    %905 = vmatpush1.bf16.msra.mxu0 0
    %906 = vmatprep.subr.bf16.mxu0 0
    %907 = vmatpush1.bf16.msra.mxu0 0
    %908 = vmatprep.subr.bf16.mxu0 0
    %909 = vmatpush1.bf16.msra.mxu0 0
    %910 = vmatprep.subr.bf16.mxu0 0
    %911 = vmatpush1.bf16.msra.mxu0 0
    %912 = vmatprep.subr.bf16.mxu0 0
    %913 = vmatpush1.bf16.msra.mxu0 0
    %914 = vmatprep.subr.bf16.mxu0 0
    %915 = vmatpush1.bf16.msra.mxu0 0
    %916 = vmatprep.subr.bf16.mxu0 0
    %917 = vmatpush1.bf16.msra.mxu0 0
    %918 = vmatprep.subr.bf16.mxu0 0
    %919 = vmatpush1.bf16.msra.mxu0 0
    %920 = vmatprep.subr.bf16.mxu0 0
    %921 = vmatpush1.bf16.msra.mxu0 0
    %922 = vmatprep.subr.bf16.mxu0 0
    %923 = vmatpush1.bf16.msra.mxu0 0
    %924 = vmatprep.subr.bf16.mxu0 0
    %925 = vmatpush1.bf16.msra.mxu0 0
    %926 = vmatprep.subr.bf16.mxu0 0
    %927 = vmatpush1.bf16.msra.mxu0 0
    %928 = vmatprep.subr.bf16.mxu0 0
    %929 = vmatpush1.bf16.msra.mxu0 0
    %930 = vmatprep.subr.bf16.mxu0 0
    %931 = vmatpush1.bf16.msra.mxu0 0
    %932 = vmatprep.mubr.bf16.mxu0 0
    %933 = vmatmul.mubr.bf16.gmra.mrb[0].mxu0 %v898
    %v934 = vpop.f32.mrb[0].mxu0
    %v935 = vadd.f32 0.0, %v934
    %v936 = vpop.f32.mrb[0].mxu0
    %v937 = vpop.f32.mrb[0].mxu0
    %v938 = vpop.f32.mrb[0].mxu0
    %939 = vdwg.mxu0
    %v940 = vadd.f32 %v772, %v935
    %v941 = vpack.c.bf16 %v445, %v444
    %v942 = vpack.c.bf16 %v447, %v446
    %943 = vrot.lane.b32.xlu0 %v449, 32
    %v944 = vpop.permute.xlu0 %943
    %v946 = vsel %vm452, %v944, 0
    %948 = vmatprep.subr.bf16.mxu0 0
    %949 = vmatpush1.bf16.msra.mxu0 %v941
    %950 = vmatprep.subr.bf16.mxu0 0
    %951 = vmatpush1.bf16.msra.mxu0 %v942
    %952 = vmatprep.subr.bf16.mxu0 0
    %953 = vmatpush1.bf16.msra.mxu0 0
    %954 = vmatprep.subr.bf16.mxu0 0
    %955 = vmatpush1.bf16.msra.mxu0 0
    %956 = vmatprep.subr.bf16.mxu0 0
    %957 = vmatpush1.bf16.msra.mxu0 0
    %958 = vmatprep.subr.bf16.mxu0 0
    %959 = vmatpush1.bf16.msra.mxu0 0
    %960 = vmatprep.subr.bf16.mxu0 0
    %961 = vmatpush1.bf16.msra.mxu0 0
    %962 = vmatprep.subr.bf16.mxu0 0
    %963 = vmatpush1.bf16.msra.mxu0 0
    %964 = vmatprep.subr.bf16.mxu0 0
    %965 = vmatpush1.bf16.msra.mxu0 0
    %966 = vmatprep.subr.bf16.mxu0 0
    %967 = vmatpush1.bf16.msra.mxu0 0
    %968 = vmatprep.subr.bf16.mxu0 0
    %969 = vmatpush1.bf16.msra.mxu0 0
    %970 = vmatprep.subr.bf16.mxu0 0
    %971 = vmatpush1.bf16.msra.mxu0 0
    %972 = vmatprep.subr.bf16.mxu0 0
    %973 = vmatpush1.bf16.msra.mxu0 0
    %974 = vmatprep.subr.bf16.mxu0 0
    %975 = vmatpush1.bf16.msra.mxu0 0
    %976 = vmatprep.subr.bf16.mxu0 0
    %977 = vmatpush1.bf16.msra.mxu0 0
    %978 = vmatprep.subr.bf16.mxu0 0
    %979 = vmatpush1.bf16.msra.mxu0 0
    %980 = vmatprep.mubr.bf16.mxu0 0
    %981 = vmatmul.mubr.bf16.gmra.mrb[0].mxu0 %v946
    %v982 = vpop.f32.mrb[0].mxu0
    %v983 = vadd.f32 0.0, %v982
    %v984 = vpop.f32.mrb[0].mxu0
    %v985 = vpop.f32.mrb[0].mxu0
    %v986 = vpop.f32.mrb[0].mxu0
    %987 = vdwg.mxu0
    %v988 = vsel %vm496, %v983, -inf
    %989 = vmax.xlane.f32.xlu0 %v988
    %v990 = vpop.xlane.xlu0 %989
    %v991 = vsub.f32 %v983, %v990
    %v992 = vmul.f32 %v991, 1.442695
    %v993 = vpow.pop %v992
    %v994 = vpack.c.bf16 %v993, %v993
    %995 = vrot.lane.b32.xlu0 %v448, 32
    %v996 = vpop.permute.xlu0 %995
    %v998 = vsel %vm496, %v994, 0
    %v1001 = vsel %vm507, %v996, 0
    %1003 = vmatprep.subr.bf16.mxu0 0
    %1004 = vmatpush1.bf16.msra.mxu0 %v1001
    %1005 = vmatprep.subr.bf16.mxu0 0
    %1006 = vmatpush1.bf16.msra.mxu0 0
    %1007 = vmatprep.subr.bf16.mxu0 0
    %1008 = vmatpush1.bf16.msra.mxu0 0
    %1009 = vmatprep.subr.bf16.mxu0 0
    %1010 = vmatpush1.bf16.msra.mxu0 0
    %1011 = vmatprep.subr.bf16.mxu0 0
    %1012 = vmatpush1.bf16.msra.mxu0 0
    %1013 = vmatprep.subr.bf16.mxu0 0
    %1014 = vmatpush1.bf16.msra.mxu0 0
    %1015 = vmatprep.subr.bf16.mxu0 0
    %1016 = vmatpush1.bf16.msra.mxu0 0
    %1017 = vmatprep.subr.bf16.mxu0 0
    %1018 = vmatpush1.bf16.msra.mxu0 0
    %1019 = vmatprep.subr.bf16.mxu0 0
    %1020 = vmatpush1.bf16.msra.mxu0 0
    %1021 = vmatprep.subr.bf16.mxu0 0
    %1022 = vmatpush1.bf16.msra.mxu0 0
    %1023 = vmatprep.subr.bf16.mxu0 0
    %1024 = vmatpush1.bf16.msra.mxu0 0
    %1025 = vmatprep.subr.bf16.mxu0 0
    %1026 = vmatpush1.bf16.msra.mxu0 0
    %1027 = vmatprep.subr.bf16.mxu0 0
    %1028 = vmatpush1.bf16.msra.mxu0 0
    %1029 = vmatprep.subr.bf16.mxu0 0
    %1030 = vmatpush1.bf16.msra.mxu0 0
    %1031 = vmatprep.subr.bf16.mxu0 0
    %1032 = vmatpush1.bf16.msra.mxu0 0
    %1033 = vmatprep.subr.bf16.mxu0 0
    %1034 = vmatpush1.bf16.msra.mxu0 0
    %1035 = vmatprep.mubr.bf16.mxu0 0
    %1036 = vmatmul.mubr.bf16.gmra.mrb[0].mxu0 %v998
    %v1037 = vpop.f32.mrb[0].mxu0
    %v1038 = vadd.f32 0.0, %v1037
    %v1039 = vpop.f32.mrb[0].mxu0
    %v1040 = vpop.f32.mrb[0].mxu0
    %v1041 = vpop.f32.mrb[0].mxu0
    %1042 = vdwg.mxu0
    %v1043 = vsel %vm496, %v993, 0.0
    %1044 = vadd.xlane.f32.xlu0 %v1043
    %v1045 = vpop.xlane.xlu0 %1044
    %v1046 = vrcp.pop %v1045
    %v1047 = vmul.f32 %v1038, %v1046
    %v1048 = vpack.c.bf16 %v1047, %v1047
    %v1053 = vunpack.c.l.b16 %v412
    %v1054 = vunpack.c.l.b16 %v413
    %v1055 = vunpack.c.l.b16 %v414
    %v1056 = vunpack.c.l.b16 %v415
    %v1057 = vpack.c.b16 %v1054, %v1053
    %v1058 = vpack.c.b16 %v1056, %v1055
    %v1062 = vsel %vm452, %v1048, 0
    %1064 = vmatprep.subr.bf16.mxu0 0
    %1065 = vmatpush1.bf16.msra.mxu0 %v1057
    %1066 = vmatprep.subr.bf16.mxu0 0
    %1067 = vmatpush1.bf16.msra.mxu0 %v1058
    %1068 = vmatprep.subr.bf16.mxu0 0
    %1069 = vmatpush1.bf16.msra.mxu0 0
    %1070 = vmatprep.subr.bf16.mxu0 0
    %1071 = vmatpush1.bf16.msra.mxu0 0
    %1072 = vmatprep.subr.bf16.mxu0 0
    %1073 = vmatpush1.bf16.msra.mxu0 0
    %1074 = vmatprep.subr.bf16.mxu0 0
    %1075 = vmatpush1.bf16.msra.mxu0 0
    %1076 = vmatprep.subr.bf16.mxu0 0
    %1077 = vmatpush1.bf16.msra.mxu0 0
    %1078 = vmatprep.subr.bf16.mxu0 0
    %1079 = vmatpush1.bf16.msra.mxu0 0
    %1080 = vmatprep.subr.bf16.mxu0 0
    %1081 = vmatpush1.bf16.msra.mxu0 0
    %1082 = vmatprep.subr.bf16.mxu0 0
    %1083 = vmatpush1.bf16.msra.mxu0 0
    %1084 = vmatprep.subr.bf16.mxu0 0
    %1085 = vmatpush1.bf16.msra.mxu0 0
    %1086 = vmatprep.subr.bf16.mxu0 0
    %1087 = vmatpush1.bf16.msra.mxu0 0
    %1088 = vmatprep.subr.bf16.mxu0 0
    %1089 = vmatpush1.bf16.msra.mxu0 0
    %1090 = vmatprep.subr.bf16.mxu0 0
    %1091 = vmatpush1.bf16.msra.mxu0 0
    %1092 = vmatprep.subr.bf16.mxu0 0
    %1093 = vmatpush1.bf16.msra.mxu0 0
    %1094 = vmatprep.subr.bf16.mxu0 0
    %1095 = vmatpush1.bf16.msra.mxu0 0
    %1096 = vmatprep.mubr.bf16.mxu0 0
    %1097 = vmatmul.mubr.bf16.gmra.mrb[0].mxu0 %v1062
    %v1098 = vpop.f32.mrb[0].mxu0
    %v1099 = vadd.f32 0.0, %v1098
    %v1100 = vpop.f32.mrb[0].mxu0
    %v1101 = vpop.f32.mrb[0].mxu0
    %v1102 = vpop.f32.mrb[0].mxu0
    %1103 = vdwg.mxu0
    %v1104 = vadd.f32 %v940, %v1099
    %1105 = vxpose.xlu0.b32.start [1/16] %v393, 128
    %1106 = vxpose.xlu0.b32.cont [2/16] 0.0, 128
    %1107 = vxpose.xlu0.b32.cont [3/16] 0.0, 128
    %1108 = vxpose.xlu0.b32.cont [4/16] 0.0, 128
    %1109 = vxpose.xlu0.b32.cont [5/16] 0.0, 128
    %1110 = vxpose.xlu0.b32.cont [6/16] 0.0, 128
    %1111 = vxpose.xlu0.b32.cont [7/16] 0.0, 128
    %1112 = vxpose.xlu0.b32.cont [8/16] 0.0, 128
    %1113 = vxpose.xlu0.b32.cont [9/16] 0.0, 128
    %1114 = vxpose.xlu0.b32.cont [10/16] 0.0, 128
    %1115 = vxpose.xlu0.b32.cont [11/16] 0.0, 128
    %1116 = vxpose.xlu0.b32.cont [12/16] 0.0, 128
    %1117 = vxpose.xlu0.b32.cont [13/16] 0.0, 128
    %1118 = vxpose.xlu0.b32.cont [14/16] 0.0, 128
    %1119 = vxpose.xlu0.b32.cont [15/16] 0.0, 128
    %1120 = vxpose.xlu0.b32.end [16/16] 0.0, 128
    %v1121 = vpop.trf.xlu0
    %v1122 = vpop.trf.xlu0
    %v1123 = vpop.trf.xlu0
    %v1124 = vpop.trf.xlu0
    %v1125 = vpop.trf.xlu0
    %v1126 = vpop.trf.xlu0
    %v1127 = vpop.trf.xlu0
    %v1128 = vpop.trf.xlu0
    %v1129 = vpop.trf.xlu0
    %v1130 = vpop.trf.xlu0
    %v1131 = vpop.trf.xlu0
    %v1132 = vpop.trf.xlu0
    %v1133 = vpop.trf.xlu0
    %v1134 = vpop.trf.xlu0
    %v1135 = vpop.trf.xlu0
    %v1136 = vpop.trf.xlu0
    %v1137 = vpack.c.bf16 %v399, %v399
    %v1138 = vpack.c.bf16 %v387, %v387
    %v1139 = vpack.c.bf16 %v1122, %v1121
    %v1140 = vpack.c.bf16 %v1124, %v1123
    %v1142 = vsel %vm452, %v1138, 0
    %1144 = vmatprep.subr.bf16.mxu0 0
    %1145 = vmatpush1.bf16.msra.mxu0 %v1139
    %1146 = vmatprep.subr.bf16.mxu0 0
    %1147 = vmatpush1.bf16.msra.mxu0 %v1140
    %1148 = vmatprep.subr.bf16.mxu0 0
    %1149 = vmatpush1.bf16.msra.mxu0 0
    %1150 = vmatprep.subr.bf16.mxu0 0
    %1151 = vmatpush1.bf16.msra.mxu0 0
    %1152 = vmatprep.subr.bf16.mxu0 0
    %1153 = vmatpush1.bf16.msra.mxu0 0
    %1154 = vmatprep.subr.bf16.mxu0 0
    %1155 = vmatpush1.bf16.msra.mxu0 0
    %1156 = vmatprep.subr.bf16.mxu0 0
    %1157 = vmatpush1.bf16.msra.mxu0 0
    %1158 = vmatprep.subr.bf16.mxu0 0
    %1159 = vmatpush1.bf16.msra.mxu0 0
    %1160 = vmatprep.subr.bf16.mxu0 0
    %1161 = vmatpush1.bf16.msra.mxu0 0
    %1162 = vmatprep.subr.bf16.mxu0 0
    %1163 = vmatpush1.bf16.msra.mxu0 0
    %1164 = vmatprep.subr.bf16.mxu0 0
    %1165 = vmatpush1.bf16.msra.mxu0 0
    %1166 = vmatprep.subr.bf16.mxu0 0
    %1167 = vmatpush1.bf16.msra.mxu0 0
    %1168 = vmatprep.subr.bf16.mxu0 0
    %1169 = vmatpush1.bf16.msra.mxu0 0
    %1170 = vmatprep.subr.bf16.mxu0 0
    %1171 = vmatpush1.bf16.msra.mxu0 0
    %1172 = vmatprep.subr.bf16.mxu0 0
    %1173 = vmatpush1.bf16.msra.mxu0 0
    %1174 = vmatprep.subr.bf16.mxu0 0
    %1175 = vmatpush1.bf16.msra.mxu0 0
    %1176 = vmatprep.mubr.bf16.mxu0 0
    %1177 = vmatmul.mubr.bf16.gmra.mrb[0].mxu0 %v1142
    %v1178 = vpop.f32.mrb[0].mxu0
    %v1179 = vadd.f32 0.0, %v1178
    %v1180 = vpop.f32.mrb[0].mxu0
    %v1181 = vpop.f32.mrb[0].mxu0
    %v1182 = vpop.f32.mrb[0].mxu0
    %1183 = vdwg.mxu0
    %v1184 = vsel %vm496, %v1179, -inf
    %1185 = vmax.xlane.f32.xlu0 %v1184
    %v1186 = vpop.xlane.xlu0 %1185
    %v1187 = vsub.f32 %v1179, %v1186
    %v1188 = vmul.f32 %v1187, 1.442695
    %v1189 = vpow.pop %v1188
    %v1190 = vpack.c.bf16 %v1189, %v1189
    %v1192 = vsel %vm496, %v1190, 0
    %v1195 = vsel %vm507, %v1137, 0
    %1197 = vmatprep.subr.bf16.mxu0 0
    %1198 = vmatpush1.bf16.msra.mxu0 %v1195
    %1199 = vmatprep.subr.bf16.mxu0 0
    %1200 = vmatpush1.bf16.msra.mxu0 0
    %1201 = vmatprep.subr.bf16.mxu0 0
    %1202 = vmatpush1.bf16.msra.mxu0 0
    %1203 = vmatprep.subr.bf16.mxu0 0
    %1204 = vmatpush1.bf16.msra.mxu0 0
    %1205 = vmatprep.subr.bf16.mxu0 0
    %1206 = vmatpush1.bf16.msra.mxu0 0
    %1207 = vmatprep.subr.bf16.mxu0 0
    %1208 = vmatpush1.bf16.msra.mxu0 0
    %1209 = vmatprep.subr.bf16.mxu0 0
    %1210 = vmatpush1.bf16.msra.mxu0 0
    %1211 = vmatprep.subr.bf16.mxu0 0
    %1212 = vmatpush1.bf16.msra.mxu0 0
    %1213 = vmatprep.subr.bf16.mxu0 0
    %1214 = vmatpush1.bf16.msra.mxu0 0
    %1215 = vmatprep.subr.bf16.mxu0 0
    %1216 = vmatpush1.bf16.msra.mxu0 0
    %1217 = vmatprep.subr.bf16.mxu0 0
    %1218 = vmatpush1.bf16.msra.mxu0 0
    %1219 = vmatprep.subr.bf16.mxu0 0
    %1220 = vmatpush1.bf16.msra.mxu0 0
    %1221 = vmatprep.subr.bf16.mxu0 0
    %1222 = vmatpush1.bf16.msra.mxu0 0
    %1223 = vmatprep.subr.bf16.mxu0 0
    %1224 = vmatpush1.bf16.msra.mxu0 0
    %1225 = vmatprep.subr.bf16.mxu0 0
    %1226 = vmatpush1.bf16.msra.mxu0 0
    %1227 = vmatprep.subr.bf16.mxu0 0
    %1228 = vmatpush1.bf16.msra.mxu0 0
    %1229 = vmatprep.mubr.bf16.mxu0 0
    %1230 = vmatmul.mubr.bf16.gmra.mrb[0].mxu0 %v1192
    %v1231 = vpop.f32.mrb[0].mxu0
    %v1232 = vadd.f32 0.0, %v1231
    %v1233 = vpop.f32.mrb[0].mxu0
    %v1234 = vpop.f32.mrb[0].mxu0
    %v1235 = vpop.f32.mrb[0].mxu0
    %1236 = vdwg.mxu0
    %v1237 = vsel %vm496, %v1189, 0.0
    %1238 = vadd.xlane.f32.xlu0 %v1237
    %v1239 = vpop.xlane.xlu0 %1238
    %v1240 = vrcp.pop %v1239
    %v1241 = vmul.f32 %v1232, %v1240
    %v1242 = vpack.c.bf16 %v1241, %v1241
    %v1243 = vpack.c.bf16 %v1126, %v1125
    %v1244 = vpack.c.bf16 %v1128, %v1127
    %1246 = vrot.lane.b32.xlu0 %v1138, 96
    %v1247 = vpop.permute.xlu0 %1246
    %v1249 = vsel %vm452, %v1247, 0
    %1251 = vmatprep.subr.bf16.mxu0 0
    %1252 = vmatpush1.bf16.msra.mxu0 %v1243
    %1253 = vmatprep.subr.bf16.mxu0 0
    %1254 = vmatpush1.bf16.msra.mxu0 %v1244
    %1255 = vmatprep.subr.bf16.mxu0 0
    %1256 = vmatpush1.bf16.msra.mxu0 0
    %1257 = vmatprep.subr.bf16.mxu0 0
    %1258 = vmatpush1.bf16.msra.mxu0 0
    %1259 = vmatprep.subr.bf16.mxu0 0
    %1260 = vmatpush1.bf16.msra.mxu0 0
    %1261 = vmatprep.subr.bf16.mxu0 0
    %1262 = vmatpush1.bf16.msra.mxu0 0
    %1263 = vmatprep.subr.bf16.mxu0 0
    %1264 = vmatpush1.bf16.msra.mxu0 0
    %1265 = vmatprep.subr.bf16.mxu0 0
    %1266 = vmatpush1.bf16.msra.mxu0 0
    %1267 = vmatprep.subr.bf16.mxu0 0
    %1268 = vmatpush1.bf16.msra.mxu0 0
    %1269 = vmatprep.subr.bf16.mxu0 0
    %1270 = vmatpush1.bf16.msra.mxu0 0
    %1271 = vmatprep.subr.bf16.mxu0 0
    %1272 = vmatpush1.bf16.msra.mxu0 0
    %1273 = vmatprep.subr.bf16.mxu0 0
    %1274 = vmatpush1.bf16.msra.mxu0 0
    %1275 = vmatprep.subr.bf16.mxu0 0
    %1276 = vmatpush1.bf16.msra.mxu0 0
    %1277 = vmatprep.subr.bf16.mxu0 0
    %1278 = vmatpush1.bf16.msra.mxu0 0
    %1279 = vmatprep.subr.bf16.mxu0 0
    %1280 = vmatpush1.bf16.msra.mxu0 0
    %1281 = vmatprep.subr.bf16.mxu0 0
    %1282 = vmatpush1.bf16.msra.mxu0 0
    %1283 = vmatprep.mubr.bf16.mxu0 0
    %1284 = vmatmul.mubr.bf16.gmra.mrb[0].mxu0 %v1249
    %v1285 = vpop.f32.mrb[0].mxu0
    %v1286 = vadd.f32 0.0, %v1285
    %v1287 = vpop.f32.mrb[0].mxu0
    %v1288 = vpop.f32.mrb[0].mxu0
    %v1289 = vpop.f32.mrb[0].mxu0
    %1290 = vdwg.mxu0
    %v1291 = vsel %vm496, %v1286, -inf
    %1292 = vmax.xlane.f32.xlu0 %v1291
    %v1293 = vpop.xlane.xlu0 %1292
    %v1294 = vsub.f32 %v1286, %v1293
    %v1295 = vmul.f32 %v1294, 1.442695
    %v1296 = vpow.pop %v1295
    %v1297 = vpack.c.bf16 %v1296, %v1296
    %1299 = vrot.lane.b32.xlu0 %v1137, 96
    %v1300 = vpop.permute.xlu0 %1299
    %v1302 = vsel %vm496, %v1297, 0
    %v1305 = vsel %vm507, %v1300, 0
    %1307 = vmatprep.subr.bf16.mxu0 0
    %1308 = vmatpush1.bf16.msra.mxu0 %v1305
    %1309 = vmatprep.subr.bf16.mxu0 0
    %1310 = vmatpush1.bf16.msra.mxu0 0
    %1311 = vmatprep.subr.bf16.mxu0 0
    %1312 = vmatpush1.bf16.msra.mxu0 0
    %1313 = vmatprep.subr.bf16.mxu0 0
    %1314 = vmatpush1.bf16.msra.mxu0 0
    %1315 = vmatprep.subr.bf16.mxu0 0
    %1316 = vmatpush1.bf16.msra.mxu0 0
    %1317 = vmatprep.subr.bf16.mxu0 0
    %1318 = vmatpush1.bf16.msra.mxu0 0
    %1319 = vmatprep.subr.bf16.mxu0 0
    %1320 = vmatpush1.bf16.msra.mxu0 0
    %1321 = vmatprep.subr.bf16.mxu0 0
    %1322 = vmatpush1.bf16.msra.mxu0 0
    %1323 = vmatprep.subr.bf16.mxu0 0
    %1324 = vmatpush1.bf16.msra.mxu0 0
    %1325 = vmatprep.subr.bf16.mxu0 0
    %1326 = vmatpush1.bf16.msra.mxu0 0
    %1327 = vmatprep.subr.bf16.mxu0 0
    %1328 = vmatpush1.bf16.msra.mxu0 0
    %1329 = vmatprep.subr.bf16.mxu0 0
    %1330 = vmatpush1.bf16.msra.mxu0 0
    %1331 = vmatprep.subr.bf16.mxu0 0
    %1332 = vmatpush1.bf16.msra.mxu0 0
    %1333 = vmatprep.subr.bf16.mxu0 0
    %1334 = vmatpush1.bf16.msra.mxu0 0
    %1335 = vmatprep.subr.bf16.mxu0 0
    %1336 = vmatpush1.bf16.msra.mxu0 0
    %1337 = vmatprep.subr.bf16.mxu0 0
    %1338 = vmatpush1.bf16.msra.mxu0 0
    %1339 = vmatprep.mubr.bf16.mxu0 0
    %1340 = vmatmul.mubr.bf16.gmra.mrb[0].mxu0 %v1302
    %v1341 = vpop.f32.mrb[0].mxu0
    %v1342 = vadd.f32 0.0, %v1341
    %v1343 = vpop.f32.mrb[0].mxu0
    %v1344 = vpop.f32.mrb[0].mxu0
    %v1345 = vpop.f32.mrb[0].mxu0
    %1346 = vdwg.mxu0
    %v1347 = vsel %vm496, %v1296, 0.0
    %1348 = vadd.xlane.f32.xlu0 %v1347
    %v1349 = vpop.xlane.xlu0 %1348
    %v1350 = vrcp.pop %v1349
    %v1351 = vmul.f32 %v1342, %v1350
    %v1352 = vpack.c.bf16 %v1351, %v1351
    %v1354 = vsel %vm452, %v1352, 0
    %1356 = vmatprep.subr.bf16.mxu0 0
    %1357 = vmatpush1.bf16.msra.mxu0 %v675
    %1358 = vmatprep.subr.bf16.mxu0 0
    %1359 = vmatpush1.bf16.msra.mxu0 %v676
    %1360 = vmatprep.subr.bf16.mxu0 0
    %1361 = vmatpush1.bf16.msra.mxu0 0
    %1362 = vmatprep.subr.bf16.mxu0 0
    %1363 = vmatpush1.bf16.msra.mxu0 0
    %1364 = vmatprep.subr.bf16.mxu0 0
    %1365 = vmatpush1.bf16.msra.mxu0 0
    %1366 = vmatprep.subr.bf16.mxu0 0
    %1367 = vmatpush1.bf16.msra.mxu0 0
    %1368 = vmatprep.subr.bf16.mxu0 0
    %1369 = vmatpush1.bf16.msra.mxu0 0
    %1370 = vmatprep.subr.bf16.mxu0 0
    %1371 = vmatpush1.bf16.msra.mxu0 0
    %1372 = vmatprep.subr.bf16.mxu0 0
    %1373 = vmatpush1.bf16.msra.mxu0 0
    %1374 = vmatprep.subr.bf16.mxu0 0
    %1375 = vmatpush1.bf16.msra.mxu0 0
    %1376 = vmatprep.subr.bf16.mxu0 0
    %1377 = vmatpush1.bf16.msra.mxu0 0
    %1378 = vmatprep.subr.bf16.mxu0 0
    %1379 = vmatpush1.bf16.msra.mxu0 0
    %1380 = vmatprep.subr.bf16.mxu0 0
    %1381 = vmatpush1.bf16.msra.mxu0 0
    %1382 = vmatprep.subr.bf16.mxu0 0
    %1383 = vmatpush1.bf16.msra.mxu0 0
    %1384 = vmatprep.subr.bf16.mxu0 0
    %1385 = vmatpush1.bf16.msra.mxu0 0
    %1386 = vmatprep.subr.bf16.mxu0 0
    %1387 = vmatpush1.bf16.msra.mxu0 0
    %1388 = vmatprep.mubr.bf16.mxu0 0
    %1389 = vmatmul.mubr.bf16.gmra.mrb[0].mxu0 %v1354
    %v1390 = vpop.f32.mrb[0].mxu0
    %v1391 = vadd.f32 0.0, %v1390
    %v1392 = vpop.f32.mrb[0].mxu0
    %v1393 = vpop.f32.mrb[0].mxu0
    %v1394 = vpop.f32.mrb[0].mxu0
    %1395 = vdwg.mxu0
    %v1397 = vsel %vm452, %v1242, 0
    %1399 = vmatprep.subr.bf16.mxu0 0
    %1400 = vmatpush1.bf16.msra.mxu0 %v730
    %1401 = vmatprep.subr.bf16.mxu0 0
    %1402 = vmatpush1.bf16.msra.mxu0 %v731
    %1403 = vmatprep.subr.bf16.mxu0 0
    %1404 = vmatpush1.bf16.msra.mxu0 0
    %1405 = vmatprep.subr.bf16.mxu0 0
    %1406 = vmatpush1.bf16.msra.mxu0 0
    %1407 = vmatprep.subr.bf16.mxu0 0
    %1408 = vmatpush1.bf16.msra.mxu0 0
    %1409 = vmatprep.subr.bf16.mxu0 0
    %1410 = vmatpush1.bf16.msra.mxu0 0
    %1411 = vmatprep.subr.bf16.mxu0 0
    %1412 = vmatpush1.bf16.msra.mxu0 0
    %1413 = vmatprep.subr.bf16.mxu0 0
    %1414 = vmatpush1.bf16.msra.mxu0 0
    %1415 = vmatprep.subr.bf16.mxu0 0
    %1416 = vmatpush1.bf16.msra.mxu0 0
    %1417 = vmatprep.subr.bf16.mxu0 0
    %1418 = vmatpush1.bf16.msra.mxu0 0
    %1419 = vmatprep.subr.bf16.mxu0 0
    %1420 = vmatpush1.bf16.msra.mxu0 0
    %1421 = vmatprep.subr.bf16.mxu0 0
    %1422 = vmatpush1.bf16.msra.mxu0 0
    %1423 = vmatprep.subr.bf16.mxu0 0
    %1424 = vmatpush1.bf16.msra.mxu0 0
    %1425 = vmatprep.subr.bf16.mxu0 0
    %1426 = vmatpush1.bf16.msra.mxu0 0
    %1427 = vmatprep.subr.bf16.mxu0 0
    %1428 = vmatpush1.bf16.msra.mxu0 0
    %1429 = vmatprep.subr.bf16.mxu0 0
    %1430 = vmatpush1.bf16.msra.mxu0 0
    %1431 = vmatprep.mubr.bf16.mxu0 0
    %1432 = vmatmul.mubr.bf16.gmra.mrb[0].mxu0 %v1397
    %v1433 = vpop.f32.mrb[0].mxu0
    %v1434 = vadd.f32 %v1391, %v1433
    %v1435 = vpop.f32.mrb[0].mxu0
    %v1436 = vpop.f32.mrb[0].mxu0
    %v1437 = vpop.f32.mrb[0].mxu0
    %1438 = vdwg.mxu0
    %v1439 = vpack.c.bf16 %v1130, %v1129
    %v1440 = vpack.c.bf16 %v1132, %v1131
    %1441 = vrot.lane.b32.xlu0 %v1138, 64
    %v1442 = vpop.permute.xlu0 %1441
    %v1444 = vsel %vm452, %v1442, 0
    %1446 = vmatprep.subr.bf16.mxu0 0
    %1447 = vmatpush1.bf16.msra.mxu0 %v1439
    %1448 = vmatprep.subr.bf16.mxu0 0
    %1449 = vmatpush1.bf16.msra.mxu0 %v1440
    %1450 = vmatprep.subr.bf16.mxu0 0
    %1451 = vmatpush1.bf16.msra.mxu0 0
    %1452 = vmatprep.subr.bf16.mxu0 0
    %1453 = vmatpush1.bf16.msra.mxu0 0
    %1454 = vmatprep.subr.bf16.mxu0 0
    %1455 = vmatpush1.bf16.msra.mxu0 0
    %1456 = vmatprep.subr.bf16.mxu0 0
    %1457 = vmatpush1.bf16.msra.mxu0 0
    %1458 = vmatprep.subr.bf16.mxu0 0
    %1459 = vmatpush1.bf16.msra.mxu0 0
    %1460 = vmatprep.subr.bf16.mxu0 0
    %1461 = vmatpush1.bf16.msra.mxu0 0
    %1462 = vmatprep.subr.bf16.mxu0 0
    %1463 = vmatpush1.bf16.msra.mxu0 0
    %1464 = vmatprep.subr.bf16.mxu0 0
    %1465 = vmatpush1.bf16.msra.mxu0 0
    %1466 = vmatprep.subr.bf16.mxu0 0
    %1467 = vmatpush1.bf16.msra.mxu0 0
    %1468 = vmatprep.subr.bf16.mxu0 0
    %1469 = vmatpush1.bf16.msra.mxu0 0
    %1470 = vmatprep.subr.bf16.mxu0 0
    %1471 = vmatpush1.bf16.msra.mxu0 0
    %1472 = vmatprep.subr.bf16.mxu0 0
    %1473 = vmatpush1.bf16.msra.mxu0 0
    %1474 = vmatprep.subr.bf16.mxu0 0
    %1475 = vmatpush1.bf16.msra.mxu0 0
    %1476 = vmatprep.subr.bf16.mxu0 0
    %1477 = vmatpush1.bf16.msra.mxu0 0
    %1478 = vmatprep.mubr.bf16.mxu0 0
    %1479 = vmatmul.mubr.bf16.gmra.mrb[0].mxu0 %v1444
    %v1480 = vpop.f32.mrb[0].mxu0
    %v1481 = vadd.f32 0.0, %v1480
    %v1482 = vpop.f32.mrb[0].mxu0
    %v1483 = vpop.f32.mrb[0].mxu0
    %v1484 = vpop.f32.mrb[0].mxu0
    %1485 = vdwg.mxu0
    %v1486 = vsel %vm496, %v1481, -inf
    %1487 = vmax.xlane.f32.xlu0 %v1486
    %v1488 = vpop.xlane.xlu0 %1487
    %v1489 = vsub.f32 %v1481, %v1488
    %v1490 = vmul.f32 %v1489, 1.442695
    %v1491 = vpow.pop %v1490
    %v1492 = vpack.c.bf16 %v1491, %v1491
    %1493 = vrot.lane.b32.xlu0 %v1137, 64
    %v1494 = vpop.permute.xlu0 %1493
    %v1496 = vsel %vm496, %v1492, 0
    %v1499 = vsel %vm507, %v1494, 0
    %1501 = vmatprep.subr.bf16.mxu0 0
    %1502 = vmatpush1.bf16.msra.mxu0 %v1499
    %1503 = vmatprep.subr.bf16.mxu0 0
    %1504 = vmatpush1.bf16.msra.mxu0 0
    %1505 = vmatprep.subr.bf16.mxu0 0
    %1506 = vmatpush1.bf16.msra.mxu0 0
    %1507 = vmatprep.subr.bf16.mxu0 0
    %1508 = vmatpush1.bf16.msra.mxu0 0
    %1509 = vmatprep.subr.bf16.mxu0 0
    %1510 = vmatpush1.bf16.msra.mxu0 0
    %1511 = vmatprep.subr.bf16.mxu0 0
    %1512 = vmatpush1.bf16.msra.mxu0 0
    %1513 = vmatprep.subr.bf16.mxu0 0
    %1514 = vmatpush1.bf16.msra.mxu0 0
    %1515 = vmatprep.subr.bf16.mxu0 0
    %1516 = vmatpush1.bf16.msra.mxu0 0
    %1517 = vmatprep.subr.bf16.mxu0 0
    %1518 = vmatpush1.bf16.msra.mxu0 0
    %1519 = vmatprep.subr.bf16.mxu0 0
    %1520 = vmatpush1.bf16.msra.mxu0 0
    %1521 = vmatprep.subr.bf16.mxu0 0
    %1522 = vmatpush1.bf16.msra.mxu0 0
    %1523 = vmatprep.subr.bf16.mxu0 0
    %1524 = vmatpush1.bf16.msra.mxu0 0
    %1525 = vmatprep.subr.bf16.mxu0 0
    %1526 = vmatpush1.bf16.msra.mxu0 0
    %1527 = vmatprep.subr.bf16.mxu0 0
    %1528 = vmatpush1.bf16.msra.mxu0 0
    %1529 = vmatprep.subr.bf16.mxu0 0
    %1530 = vmatpush1.bf16.msra.mxu0 0
    %1531 = vmatprep.subr.bf16.mxu0 0
    %1532 = vmatpush1.bf16.msra.mxu0 0
    %1533 = vmatprep.mubr.bf16.mxu0 0
    %1534 = vmatmul.mubr.bf16.gmra.mrb[0].mxu0 %v1496
    %v1535 = vpop.f32.mrb[0].mxu0
    %v1536 = vadd.f32 0.0, %v1535
    %v1537 = vpop.f32.mrb[0].mxu0
    %v1538 = vpop.f32.mrb[0].mxu0
    %v1539 = vpop.f32.mrb[0].mxu0
    %1540 = vdwg.mxu0
    %v1541 = vsel %vm496, %v1491, 0.0
    %1542 = vadd.xlane.f32.xlu0 %v1541
    %v1543 = vpop.xlane.xlu0 %1542
    %v1544 = vrcp.pop %v1543
    %v1545 = vmul.f32 %v1536, %v1544
    %v1546 = vpack.c.bf16 %v1545, %v1545
    %v1548 = vsel %vm452, %v1546, 0
    %1550 = vmatprep.subr.bf16.mxu0 0
    %1551 = vmatpush1.bf16.msra.mxu0 %v893
    %1552 = vmatprep.subr.bf16.mxu0 0
    %1553 = vmatpush1.bf16.msra.mxu0 %v894
    %1554 = vmatprep.subr.bf16.mxu0 0
    %1555 = vmatpush1.bf16.msra.mxu0 0
    %1556 = vmatprep.subr.bf16.mxu0 0
    %1557 = vmatpush1.bf16.msra.mxu0 0
    %1558 = vmatprep.subr.bf16.mxu0 0
    %1559 = vmatpush1.bf16.msra.mxu0 0
    %1560 = vmatprep.subr.bf16.mxu0 0
    %1561 = vmatpush1.bf16.msra.mxu0 0
    %1562 = vmatprep.subr.bf16.mxu0 0
    %1563 = vmatpush1.bf16.msra.mxu0 0
    %1564 = vmatprep.subr.bf16.mxu0 0
    %1565 = vmatpush1.bf16.msra.mxu0 0
    %1566 = vmatprep.subr.bf16.mxu0 0
    %1567 = vmatpush1.bf16.msra.mxu0 0
    %1568 = vmatprep.subr.bf16.mxu0 0
    %1569 = vmatpush1.bf16.msra.mxu0 0
    %1570 = vmatprep.subr.bf16.mxu0 0
    %1571 = vmatpush1.bf16.msra.mxu0 0
    %1572 = vmatprep.subr.bf16.mxu0 0
    %1573 = vmatpush1.bf16.msra.mxu0 0
    %1574 = vmatprep.subr.bf16.mxu0 0
    %1575 = vmatpush1.bf16.msra.mxu0 0
    %1576 = vmatprep.subr.bf16.mxu0 0
    %1577 = vmatpush1.bf16.msra.mxu0 0
    %1578 = vmatprep.subr.bf16.mxu0 0
    %1579 = vmatpush1.bf16.msra.mxu0 0
    %1580 = vmatprep.subr.bf16.mxu0 0
    %1581 = vmatpush1.bf16.msra.mxu0 0
    %1582 = vmatprep.mubr.bf16.mxu0 0
    %1583 = vmatmul.mubr.bf16.gmra.mrb[0].mxu0 %v1548
    %v1584 = vpop.f32.mrb[0].mxu0
    %v1585 = vadd.f32 0.0, %v1584
    %v1586 = vpop.f32.mrb[0].mxu0
    %v1587 = vpop.f32.mrb[0].mxu0
    %v1588 = vpop.f32.mrb[0].mxu0
    %1589 = vdwg.mxu0
    %v1590 = vadd.f32 %v1434, %v1585
    %v1591 = vpack.c.bf16 %v1134, %v1133
    %v1592 = vpack.c.bf16 %v1136, %v1135
    %1593 = vrot.lane.b32.xlu0 %v1138, 32
    %v1594 = vpop.permute.xlu0 %1593
    %v1596 = vsel %vm452, %v1594, 0
    %1598 = vmatprep.subr.bf16.mxu0 0
    %1599 = vmatpush1.bf16.msra.mxu0 %v1591
    %1600 = vmatprep.subr.bf16.mxu0 0
    %1601 = vmatpush1.bf16.msra.mxu0 %v1592
    %1602 = vmatprep.subr.bf16.mxu0 0
    %1603 = vmatpush1.bf16.msra.mxu0 0
    %1604 = vmatprep.subr.bf16.mxu0 0
    %1605 = vmatpush1.bf16.msra.mxu0 0
    %1606 = vmatprep.subr.bf16.mxu0 0
    %1607 = vmatpush1.bf16.msra.mxu0 0
    %1608 = vmatprep.subr.bf16.mxu0 0
    %1609 = vmatpush1.bf16.msra.mxu0 0
    %1610 = vmatprep.subr.bf16.mxu0 0
    %1611 = vmatpush1.bf16.msra.mxu0 0
    %1612 = vmatprep.subr.bf16.mxu0 0
    %1613 = vmatpush1.bf16.msra.mxu0 0
    %1614 = vmatprep.subr.bf16.mxu0 0
    %1615 = vmatpush1.bf16.msra.mxu0 0
    %1616 = vmatprep.subr.bf16.mxu0 0
    %1617 = vmatpush1.bf16.msra.mxu0 0
    %1618 = vmatprep.subr.bf16.mxu0 0
    %1619 = vmatpush1.bf16.msra.mxu0 0
    %1620 = vmatprep.subr.bf16.mxu0 0
    %1621 = vmatpush1.bf16.msra.mxu0 0
    %1622 = vmatprep.subr.bf16.mxu0 0
    %1623 = vmatpush1.bf16.msra.mxu0 0
    %1624 = vmatprep.subr.bf16.mxu0 0
    %1625 = vmatpush1.bf16.msra.mxu0 0
    %1626 = vmatprep.subr.bf16.mxu0 0
    %1627 = vmatpush1.bf16.msra.mxu0 0
    %1628 = vmatprep.subr.bf16.mxu0 0
    %1629 = vmatpush1.bf16.msra.mxu0 0
    %1630 = vmatprep.mubr.bf16.mxu0 0
    %1631 = vmatmul.mubr.bf16.gmra.mrb[0].mxu0 %v1596
    %v1632 = vpop.f32.mrb[0].mxu0
    %v1633 = vadd.f32 0.0, %v1632
    %v1634 = vpop.f32.mrb[0].mxu0
    %v1635 = vpop.f32.mrb[0].mxu0
    %v1636 = vpop.f32.mrb[0].mxu0
    %1637 = vdwg.mxu0
    %v1638 = vsel %vm496, %v1633, -inf
    %1639 = vmax.xlane.f32.xlu0 %v1638
    %v1640 = vpop.xlane.xlu0 %1639
    %v1641 = vsub.f32 %v1633, %v1640
    %v1642 = vmul.f32 %v1641, 1.442695
    %v1643 = vpow.pop %v1642
    %v1644 = vpack.c.bf16 %v1643, %v1643
    %1645 = vrot.lane.b32.xlu0 %v1137, 32
    %v1646 = vpop.permute.xlu0 %1645
    %v1648 = vsel %vm496, %v1644, 0
    %v1651 = vsel %vm507, %v1646, 0
    %1653 = vmatprep.subr.bf16.mxu0 0
    %1654 = vmatpush1.bf16.msra.mxu0 %v1651
    %1655 = vmatprep.subr.bf16.mxu0 0
    %1656 = vmatpush1.bf16.msra.mxu0 0
    %1657 = vmatprep.subr.bf16.mxu0 0
    %1658 = vmatpush1.bf16.msra.mxu0 0
    %1659 = vmatprep.subr.bf16.mxu0 0
    %1660 = vmatpush1.bf16.msra.mxu0 0
    %1661 = vmatprep.subr.bf16.mxu0 0
    %1662 = vmatpush1.bf16.msra.mxu0 0
    %1663 = vmatprep.subr.bf16.mxu0 0
    %1664 = vmatpush1.bf16.msra.mxu0 0
    %1665 = vmatprep.subr.bf16.mxu0 0
    %1666 = vmatpush1.bf16.msra.mxu0 0
    %1667 = vmatprep.subr.bf16.mxu0 0
    %1668 = vmatpush1.bf16.msra.mxu0 0
    %1669 = vmatprep.subr.bf16.mxu0 0
    %1670 = vmatpush1.bf16.msra.mxu0 0
    %1671 = vmatprep.subr.bf16.mxu0 0
    %1672 = vmatpush1.bf16.msra.mxu0 0
    %1673 = vmatprep.subr.bf16.mxu0 0
    %1674 = vmatpush1.bf16.msra.mxu0 0
    %1675 = vmatprep.subr.bf16.mxu0 0
    %1676 = vmatpush1.bf16.msra.mxu0 0
    %1677 = vmatprep.subr.bf16.mxu0 0
    %1678 = vmatpush1.bf16.msra.mxu0 0
    %1679 = vmatprep.subr.bf16.mxu0 0
    %1680 = vmatpush1.bf16.msra.mxu0 0
    %1681 = vmatprep.subr.bf16.mxu0 0
    %1682 = vmatpush1.bf16.msra.mxu0 0
    %1683 = vmatprep.subr.bf16.mxu0 0
    %1684 = vmatpush1.bf16.msra.mxu0 0
    %1685 = vmatprep.mubr.bf16.mxu0 0
    %1686 = vmatmul.mubr.bf16.gmra.mrb[0].mxu0 %v1648
    %v1687 = vpop.f32.mrb[0].mxu0
    %v1688 = vadd.f32 0.0, %v1687
    %v1689 = vpop.f32.mrb[0].mxu0
    %v1690 = vpop.f32.mrb[0].mxu0
    %v1691 = vpop.f32.mrb[0].mxu0
    %1692 = vdwg.mxu0
    %v1693 = vsel %vm496, %v1643, 0.0
    %1694 = vadd.xlane.f32.xlu0 %v1693
    %v1695 = vpop.xlane.xlu0 %1694
    %v1696 = vrcp.pop %v1695
    %v1697 = vmul.f32 %v1688, %v1696
    %v1698 = vpack.c.bf16 %v1697, %v1697
    %v1700 = vsel %vm452, %v1698, 0
    %1702 = vmatprep.subr.bf16.mxu0 0
    %1703 = vmatpush1.bf16.msra.mxu0 %v1057
    %1704 = vmatprep.subr.bf16.mxu0 0
    %1705 = vmatpush1.bf16.msra.mxu0 %v1058
    %1706 = vmatprep.subr.bf16.mxu0 0
    %1707 = vmatpush1.bf16.msra.mxu0 0
    %1708 = vmatprep.subr.bf16.mxu0 0
    %1709 = vmatpush1.bf16.msra.mxu0 0
    %1710 = vmatprep.subr.bf16.mxu0 0
    %1711 = vmatpush1.bf16.msra.mxu0 0
    %1712 = vmatprep.subr.bf16.mxu0 0
    %1713 = vmatpush1.bf16.msra.mxu0 0
    %1714 = vmatprep.subr.bf16.mxu0 0
    %1715 = vmatpush1.bf16.msra.mxu0 0
    %1716 = vmatprep.subr.bf16.mxu0 0
    %1717 = vmatpush1.bf16.msra.mxu0 0
    %1718 = vmatprep.subr.bf16.mxu0 0
    %1719 = vmatpush1.bf16.msra.mxu0 0
    %1720 = vmatprep.subr.bf16.mxu0 0
    %1721 = vmatpush1.bf16.msra.mxu0 0
    %1722 = vmatprep.subr.bf16.mxu0 0
    %1723 = vmatpush1.bf16.msra.mxu0 0
    %1724 = vmatprep.subr.bf16.mxu0 0
    %1725 = vmatpush1.bf16.msra.mxu0 0
    %1726 = vmatprep.subr.bf16.mxu0 0
    %1727 = vmatpush1.bf16.msra.mxu0 0
    %1728 = vmatprep.subr.bf16.mxu0 0
    %1729 = vmatpush1.bf16.msra.mxu0 0
    %1730 = vmatprep.subr.bf16.mxu0 0
    %1731 = vmatpush1.bf16.msra.mxu0 0
    %1732 = vmatprep.subr.bf16.mxu0 0
    %1733 = vmatpush1.bf16.msra.mxu0 0
    %1734 = vmatprep.mubr.bf16.mxu0 0
    %1735 = vmatmul.mubr.bf16.gmra.mrb[0].mxu0 %v1700
    %v1736 = vpop.f32.mrb[0].mxu0
    %v1737 = vadd.f32 0.0, %v1736
    %v1738 = vpop.f32.mrb[0].mxu0
    %v1739 = vpop.f32.mrb[0].mxu0
    %v1740 = vpop.f32.mrb[0].mxu0
    %1741 = vdwg.mxu0
    %v1742 = vadd.f32 %v1590, %v1737
    %v1743 = vlaneseq
    %v1744 = vshrl.u32 %v1743, 7
    %v1745 = vsub.s32 3, %v1744
    %v1746 = vrot.slane %v98, %v1745
    %v1747 = vadd.f32 %v1104, %v1746
    %v1748 = vadd.f32 %v1742, %v1746
    %v1749 = vadd.f32 %v96, %v1747
    %v1750 = vadd.f32 %v97, %v1748
    %1751 = vadd.xlane.f32.xlu0 %v1749
    %v1752 = vpop.xlane.xlu0 %1751
    %1753 = vadd.xlane.f32.xlu0 %v1750
    %v1754 = vpop.xlane.xlu0 %1753
    %v1755 = vmul.f32 %v1752, %v104
    %v1756 = vmul.f32 %v1754, %v104
    %v1757 = vsub.f32 %v1749, %v1755
    %v1758 = vsub.f32 %v1750, %v1756
    %v1759 = vmul.f32 %v1757, %v1757
    %v1760 = vmul.f32 %v1758, %v1758
    %1761 = vadd.xlane.f32.xlu0 %v1759
    %v1762 = vpop.xlane.xlu0 %1761
    %1763 = vadd.xlane.f32.xlu0 %v1760
    %v1764 = vpop.xlane.xlu0 %1763
    %v1765 = vmul.f32 %v1762, %v104
    %v1766 = vmul.f32 %v1764, %v104
    %v1767 = vadd.f32 %v1765, 1e-05
    %v1768 = vadd.f32 %v1766, 1e-05
    %v1769 = vrsqrt.pop %v1767
    %v1770 = vrsqrt.pop %v1768
    %v1771 = vmul.f32 %v1757, %v1769
    %v1772 = vmul.f32 %v1758, %v1770
    %v1773 = vlaneseq
    %v1774 = vshrl.u32 %v1773, 7
    %v1775 = vsub.s32 6, %v1774
    %v1776 = vrot.slane %v98, %v1775
    %v1777 = vmul.f32 %v1771, %v1776
    %v1778 = vmul.f32 %v1772, %v1776
    %v1779 = vlaneseq
    %v1780 = vshrl.u32 %v1779, 7
    %v1781 = vsub.s32 7, %v1780
    %v1782 = vrot.slane %v98, %v1781
    %v1783 = vadd.f32 %v1777, %v1782
    %v1784 = vadd.f32 %v1778, %v1782
    %1785 = vadd.xlane.f32.xlu0 %v1783
    %v1786 = vpop.xlane.xlu0 %1785
    %1787 = vadd.xlane.f32.xlu0 %v1784
    %v1788 = vpop.xlane.xlu0 %1787
    %v1789 = vmul.f32 %v1786, %v104
    %v1790 = vmul.f32 %v1788, %v104
    %v1791 = vsub.f32 %v1783, %v1789
    %v1792 = vsub.f32 %v1784, %v1790
    %v1793 = vmul.f32 %v1791, %v1791
    %v1794 = vmul.f32 %v1792, %v1792
    %1795 = vadd.xlane.f32.xlu0 %v1793
    %v1796 = vpop.xlane.xlu0 %1795
    %1797 = vadd.xlane.f32.xlu0 %v1794
    %v1798 = vpop.xlane.xlu0 %1797
    %v1799 = vmul.f32 %v1796, %v104
    %v1800 = vmul.f32 %v1798, %v104
    %v1801 = vadd.f32 %v1799, 1e-05
    %v1802 = vadd.f32 %v1800, 1e-05
    %v1803 = vrsqrt.pop %v1801
    %v1804 = vrsqrt.pop %v1802
    %v1805 = vmul.f32 %v1791, %v1803
    %v1806 = vmul.f32 %v1792, %v1804
    %v1807 = vlaneseq
    %v1808 = vshrl.u32 %v1807, 7
    %v1809 = vsub.s32 0, %v1808
    %v1810 = vrot.slane %v99, %v1809
    %v1811 = vmul.f32 %v1805, %v1810
    %v1812 = vmul.f32 %v1806, %v1810
    %v1813 = vlaneseq
    %v1814 = vshrl.u32 %v1813, 7
    %v1815 = vsub.s32 1, %v1814
    %v1816 = vrot.slane %v99, %v1815
    %v1817 = vadd.f32 %v1811, %v1816
    %v1818 = vadd.f32 %v1812, %v1816
    %v1819 = vpack.c.bf16 %v1818, %v1817
    %v1820 = vld [vmem:[#allocation8] sm:$0xff]
    %v1821 = vld [vmem:[#allocation8 + $0x8] sm:$0xff]
    %v1822 = vld [vmem:[#allocation8 + $0x10] sm:$0xff]
    %v1823 = vld [vmem:[#allocation8 + $0x18] sm:$0xff]
    %v1824 = vld [vmem:[#allocation8 + $0x20] sm:$0xff]
    %v1825 = vld [vmem:[#allocation8 + $0x28] sm:$0xff]
    %v1826 = vld [vmem:[#allocation8 + $0x30] sm:$0xff]
    %v1827 = vld [vmem:[#allocation8 + $0x38] sm:$0xff]
    %v1828 = vld [vmem:[#allocation8 + $0x40] sm:$0xff]
    %v1829 = vld [vmem:[#allocation8 + $0x48] sm:$0xff]
    %v1830 = vld [vmem:[#allocation8 + $0x50] sm:$0xff]
    %v1831 = vld [vmem:[#allocation8 + $0x58] sm:$0xff]
    %v1832 = vld [vmem:[#allocation8 + $0x60] sm:$0xff]
    %v1833 = vld [vmem:[#allocation8 + $0x68] sm:$0xff]
    %v1834 = vld [vmem:[#allocation8 + $0x70] sm:$0xff]
    %v1835 = vld [vmem:[#allocation8 + $0x78] sm:$0xff]
    %v1836 = vld [vmem:[%s5] sm:$0x3]
    %v1838 = vlaneseq
    %v1839 = vshrl.u32 %v1838, 7
    %v1840 = vsub.s32 0, %v1839
    %v1841 = vrot.slane %v1836, %v1840
    %v1842 = vlaneseq
    %v1843 = vshrl.u32 %v1842, 7
    %v1844 = vsub.s32 1, %v1843
    %v1845 = vrot.slane %v1836, %v1844
    %v1864 = vunpack.c.l.b16 %v1820
    %v1865 = vunpack.c.h.b16 %v1820
    %v1866 = vunpack.c.l.b16 %v1821
    %v1867 = vunpack.c.h.b16 %v1821
    %v1868 = vunpack.c.l.b16 %v1822
    %v1869 = vunpack.c.h.b16 %v1822
    %v1870 = vunpack.c.l.b16 %v1823
    %v1871 = vunpack.c.h.b16 %v1823
    %v1872 = vunpack.c.l.b16 %v1824
    %v1873 = vunpack.c.h.b16 %v1824
    %v1874 = vunpack.c.l.b16 %v1825
    %v1875 = vunpack.c.h.b16 %v1825
    %v1876 = vunpack.c.l.b16 %v1826
    %v1877 = vunpack.c.h.b16 %v1826
    %v1878 = vunpack.c.l.b16 %v1827
    %v1879 = vunpack.c.h.b16 %v1827
    %v1880 = vunpack.c.l.b16 %v1828
    %v1881 = vunpack.c.h.b16 %v1828
    %v1882 = vunpack.c.l.b16 %v1829
    %v1883 = vunpack.c.h.b16 %v1829
    %v1884 = vunpack.c.l.b16 %v1830
    %v1885 = vunpack.c.h.b16 %v1830
    %v1886 = vunpack.c.l.b16 %v1831
    %v1887 = vunpack.c.h.b16 %v1831
    %v1888 = vunpack.c.l.b16 %v1832
    %v1889 = vunpack.c.h.b16 %v1832
    %v1890 = vunpack.c.l.b16 %v1833
    %v1891 = vunpack.c.h.b16 %v1833
    %v1892 = vunpack.c.l.b16 %v1834
    %v1893 = vunpack.c.h.b16 %v1834
    %v1894 = vunpack.c.l.b16 %v1835
    %v1895 = vunpack.c.h.b16 %v1835
    %v1896 = vpack.c.b16 %v1866, %v1864
    %v1897 = vpack.c.b16 %v1867, %v1865
    %v1898 = vpack.c.b16 %v1870, %v1868
    %v1899 = vpack.c.b16 %v1871, %v1869
    %v1900 = vpack.c.b16 %v1874, %v1872
    %v1901 = vpack.c.b16 %v1875, %v1873
    %v1902 = vpack.c.b16 %v1878, %v1876
    %v1903 = vpack.c.b16 %v1879, %v1877
    %v1904 = vpack.c.b16 %v1882, %v1880
    %v1905 = vpack.c.b16 %v1883, %v1881
    %v1906 = vpack.c.b16 %v1886, %v1884
    %v1907 = vpack.c.b16 %v1887, %v1885
    %v1908 = vpack.c.b16 %v1890, %v1888
    %v1909 = vpack.c.b16 %v1891, %v1889
    %v1910 = vpack.c.b16 %v1894, %v1892
    %v1911 = vpack.c.b16 %v1895, %v1893
    %1928 = vmatprep.subr.bf16.mxu0 %v1897
    %1929 = vmatpush1.bf16.msra.mxu0 %v1896
    %1930 = vmatprep.subr.bf16.mxu0 %v1899
    %1931 = vmatpush1.bf16.msra.mxu0 %v1898
    %1932 = vmatprep.subr.bf16.mxu0 %v1901
    %1933 = vmatpush1.bf16.msra.mxu0 %v1900
    %1934 = vmatprep.subr.bf16.mxu0 %v1903
    %1935 = vmatpush1.bf16.msra.mxu0 %v1902
    %1936 = vmatprep.subr.bf16.mxu0 %v1905
    %1937 = vmatpush1.bf16.msra.mxu0 %v1904
    %1938 = vmatprep.subr.bf16.mxu0 %v1907
    %1939 = vmatpush1.bf16.msra.mxu0 %v1906
    %1940 = vmatprep.subr.bf16.mxu0 %v1909
    %1941 = vmatpush1.bf16.msra.mxu0 %v1908
    %1942 = vmatprep.subr.bf16.mxu0 %v1911
    %1943 = vmatpush1.bf16.msra.mxu0 %v1910
    %1944 = vmatprep.subr.bf16.mxu0 0
    %1945 = vmatpush1.bf16.msra.mxu0 0
    %1946 = vmatprep.subr.bf16.mxu0 0
    %1947 = vmatpush1.bf16.msra.mxu0 0
    %1948 = vmatprep.subr.bf16.mxu0 0
    %1949 = vmatpush1.bf16.msra.mxu0 0
    %1950 = vmatprep.subr.bf16.mxu0 0
    %1951 = vmatpush1.bf16.msra.mxu0 0
    %1952 = vmatprep.subr.bf16.mxu0 0
    %1953 = vmatpush1.bf16.msra.mxu0 0
    %1954 = vmatprep.subr.bf16.mxu0 0
    %1955 = vmatpush1.bf16.msra.mxu0 0
    %1956 = vmatprep.subr.bf16.mxu0 0
    %1957 = vmatpush1.bf16.msra.mxu0 0
    %1958 = vmatprep.subr.bf16.mxu0 0
    %1959 = vmatpush1.bf16.msra.mxu0 0
    %1960 = vmatprep.mubr.bf16.mxu0 0
    %1961 = vmatmul.mubr.bf16.gmra.mrb[0].mxu0 %v1819
    %v1962 = vpop.f32.mrb[0].mxu0
    %v1963 = vadd.f32 %v1841, %v1962
    %v1964 = vpop.f32.mrb[0].mxu0
    %v1965 = vadd.f32 %v1845, %v1964
    %v1966 = vpop.f32.mrb[0].mxu0
    %v1967 = vadd.f32 %v1841, %v1966
    %v1968 = vpop.f32.mrb[0].mxu0
    %v1969 = vadd.f32 %v1845, %v1968
    %1970 = vdwg.mxu0
    %v1971 = vmul.f32 %v1963, 0.5
    %v1972 = vmul.f32 %v1965, 0.5
    %v1973 = vmul.f32 %v1967, 0.5
    %v1974 = vmul.f32 %v1969, 0.5
    %v1975 = vmul.f32 %v1963, 0.70710677
    %v1976 = vmul.f32 %v1965, 0.70710677
    %v1977 = vmul.f32 %v1967, 0.70710677
    %v1978 = vmul.f32 %v1969, 0.70710677
    %v1979 = verf.f32.pop %v1975
    %v1980 = verf.f32.pop %v1976
    %v1981 = verf.f32.pop %v1977
    %v1982 = verf.f32.pop %v1978
    %v1983 = vadd.f32 %v1979, 1.0
    %v1984 = vadd.f32 %v1980, 1.0
    %v1985 = vadd.f32 %v1981, 1.0
    %v1986 = vadd.f32 %v1982, 1.0
    %v1987 = vmul.f32 %v1971, %v1983
    %v1988 = vmul.f32 %v1972, %v1984
    %v1989 = vmul.f32 %v1973, %v1985
    %v1990 = vmul.f32 %v1974, %v1986
    %v1991 = vpack.c.bf16 %v1989, %v1987
    %v1992 = vpack.c.bf16 %v1990, %v1988
    %v1993 = vld [vmem:[#allocation10] sm:$0xf]
    %v1994 = vld [vmem:[#allocation10 + $0x4] sm:$0xf]
    %v1995 = vld [vmem:[#allocation10 + $0x8] sm:$0xf]
    %v1996 = vld [vmem:[#allocation10 + $0xc] sm:$0xf]
    %v1997 = vld [vmem:[#allocation10 + $0x10] sm:$0xf]
    %v1998 = vld [vmem:[#allocation10 + $0x14] sm:$0xf]
    %v1999 = vld [vmem:[#allocation10 + $0x18] sm:$0xf]
    %v2000 = vld [vmem:[#allocation10 + $0x1c] sm:$0xf]
    %v2001 = vld [vmem:[#allocation10 + $0x20] sm:$0xf]
    %v2002 = vld [vmem:[#allocation10 + $0x24] sm:$0xf]
    %v2003 = vld [vmem:[#allocation10 + $0x28] sm:$0xf]
    %v2004 = vld [vmem:[#allocation10 + $0x2c] sm:$0xf]
    %v2005 = vld [vmem:[#allocation10 + $0x30] sm:$0xf]
    %v2006 = vld [vmem:[#allocation10 + $0x34] sm:$0xf]
    %v2007 = vld [vmem:[#allocation10 + $0x38] sm:$0xf]
    %v2008 = vld [vmem:[#allocation10 + $0x3c] sm:$0xf]
    %v2009 = vld [vmem:[#allocation10 + $0x40] sm:$0xf]
    %v2010 = vld [vmem:[#allocation10 + $0x44] sm:$0xf]
    %v2011 = vld [vmem:[#allocation10 + $0x48] sm:$0xf]
    %v2012 = vld [vmem:[#allocation10 + $0x4c] sm:$0xf]
    %v2013 = vld [vmem:[#allocation10 + $0x50] sm:$0xf]
    %v2014 = vld [vmem:[#allocation10 + $0x54] sm:$0xf]
    %v2015 = vld [vmem:[#allocation10 + $0x58] sm:$0xf]
    %v2016 = vld [vmem:[#allocation10 + $0x5c] sm:$0xf]
    %v2017 = vld [vmem:[#allocation10 + $0x60] sm:$0xf]
    %v2018 = vld [vmem:[#allocation10 + $0x64] sm:$0xf]
    %v2019 = vld [vmem:[#allocation10 + $0x68] sm:$0xf]
    %v2020 = vld [vmem:[#allocation10 + $0x6c] sm:$0xf]
    %v2021 = vld [vmem:[#allocation10 + $0x70] sm:$0xf]
    %v2022 = vld [vmem:[#allocation10 + $0x74] sm:$0xf]
    %v2023 = vld [vmem:[#allocation10 + $0x78] sm:$0xf]
    %v2024 = vld [vmem:[#allocation10 + $0x7c] sm:$0xf]
    %v2025 = vlaneseq
    %v2026 = vshrl.u32 %v2025, 7
    %v2027 = vsub.s32 2, %v2026
    %v2028 = vrot.slane %v99, %v2027
    %v2061 = vunpack.c.l.b16 %v1993
    %v2062 = vunpack.c.l.b16 %v1994
    %v2063 = vunpack.c.l.b16 %v1995
    %v2064 = vunpack.c.l.b16 %v1996
    %v2065 = vunpack.c.l.b16 %v1997
    %v2066 = vunpack.c.l.b16 %v1998
    %v2067 = vunpack.c.l.b16 %v1999
    %v2068 = vunpack.c.l.b16 %v2000
    %v2069 = vunpack.c.l.b16 %v2001
    %v2070 = vunpack.c.l.b16 %v2002
    %v2071 = vunpack.c.l.b16 %v2003
    %v2072 = vunpack.c.l.b16 %v2004
    %v2073 = vunpack.c.l.b16 %v2005
    %v2074 = vunpack.c.l.b16 %v2006
    %v2075 = vunpack.c.l.b16 %v2007
    %v2076 = vunpack.c.l.b16 %v2008
    %v2077 = vunpack.c.l.b16 %v2009
    %v2078 = vunpack.c.l.b16 %v2010
    %v2079 = vunpack.c.l.b16 %v2011
    %v2080 = vunpack.c.l.b16 %v2012
    %v2081 = vunpack.c.l.b16 %v2013
    %v2082 = vunpack.c.l.b16 %v2014
    %v2083 = vunpack.c.l.b16 %v2015
    %v2084 = vunpack.c.l.b16 %v2016
    %v2085 = vunpack.c.l.b16 %v2017
    %v2086 = vunpack.c.l.b16 %v2018
    %v2087 = vunpack.c.l.b16 %v2019
    %v2088 = vunpack.c.l.b16 %v2020
    %v2089 = vunpack.c.l.b16 %v2021
    %v2090 = vunpack.c.l.b16 %v2022
    %v2091 = vunpack.c.l.b16 %v2023
    %v2092 = vunpack.c.l.b16 %v2024
    %v2093 = vpack.c.b16 %v2062, %v2061
    %v2094 = vpack.c.b16 %v2064, %v2063
    %v2095 = vpack.c.b16 %v2066, %v2065
    %v2096 = vpack.c.b16 %v2068, %v2067
    %v2097 = vpack.c.b16 %v2070, %v2069
    %v2098 = vpack.c.b16 %v2072, %v2071
    %v2099 = vpack.c.b16 %v2074, %v2073
    %v2100 = vpack.c.b16 %v2076, %v2075
    %v2101 = vpack.c.b16 %v2078, %v2077
    %v2102 = vpack.c.b16 %v2080, %v2079
    %v2103 = vpack.c.b16 %v2082, %v2081
    %v2104 = vpack.c.b16 %v2084, %v2083
    %v2105 = vpack.c.b16 %v2086, %v2085
    %v2106 = vpack.c.b16 %v2088, %v2087
    %v2107 = vpack.c.b16 %v2090, %v2089
    %v2108 = vpack.c.b16 %v2092, %v2091
    %2125 = vmatprep.subr.bf16.mxu0 0
    %2126 = vmatpush1.bf16.msra.mxu0 %v2093
    %2127 = vmatprep.subr.bf16.mxu0 0
    %2128 = vmatpush1.bf16.msra.mxu0 %v2094
    %2129 = vmatprep.subr.bf16.mxu0 0
    %2130 = vmatpush1.bf16.msra.mxu0 %v2095
    %2131 = vmatprep.subr.bf16.mxu0 0
    %2132 = vmatpush1.bf16.msra.mxu0 %v2096
    %2133 = vmatprep.subr.bf16.mxu0 0
    %2134 = vmatpush1.bf16.msra.mxu0 %v2097
    %2135 = vmatprep.subr.bf16.mxu0 0
    %2136 = vmatpush1.bf16.msra.mxu0 %v2098
    %2137 = vmatprep.subr.bf16.mxu0 0
    %2138 = vmatpush1.bf16.msra.mxu0 %v2099
    %2139 = vmatprep.subr.bf16.mxu0 0
    %2140 = vmatpush1.bf16.msra.mxu0 %v2100
    %2141 = vmatprep.subr.bf16.mxu0 0
    %2142 = vmatpush1.bf16.msra.mxu0 %v2101
    %2143 = vmatprep.subr.bf16.mxu0 0
    %2144 = vmatpush1.bf16.msra.mxu0 %v2102
    %2145 = vmatprep.subr.bf16.mxu0 0
    %2146 = vmatpush1.bf16.msra.mxu0 %v2103
    %2147 = vmatprep.subr.bf16.mxu0 0
    %2148 = vmatpush1.bf16.msra.mxu0 %v2104
    %2149 = vmatprep.subr.bf16.mxu0 0
    %2150 = vmatpush1.bf16.msra.mxu0 %v2105
    %2151 = vmatprep.subr.bf16.mxu0 0
    %2152 = vmatpush1.bf16.msra.mxu0 %v2106
    %2153 = vmatprep.subr.bf16.mxu0 0
    %2154 = vmatpush1.bf16.msra.mxu0 %v2107
    %2155 = vmatprep.subr.bf16.mxu0 0
    %2156 = vmatpush1.bf16.msra.mxu0 %v2108
    %2157 = vmatprep.mubr.bf16.mxu0 %v1992
    %2158 = vmatmul.mubr.bf16.gmra.mrb[0].mxu0 %v1991
    %v2159 = vpop.f32.mrb[0].mxu0
    %v2160 = vadd.f32 %v2028, %v2159
    %v2161 = vpop.f32.mrb[0].mxu0
    %v2162 = vpop.f32.mrb[0].mxu0
    %v2163 = vadd.f32 %v2028, %v2162
    %v2164 = vpop.f32.mrb[0].mxu0
    %2165 = vdwg.mxu0
    %v2166 = vadd.f32 %v1749, %v2160
    %v2167 = vadd.f32 %v1750, %v2163
    %2168 = vst [vmem:[#allocation11] sm:$0xff] %v2166
    %2169 = vst [vmem:[#allocation11 + $0x8] sm:$0xff] %v2167
    // Predicated region
    $region50: #{tpu_custom_call.1} parent=1 // pred_check
      _
    $region51: #{tpu_custom_call.1} parent=1 // pred_check_branch
      %2171 = sbr.rel (0) target = $region53
    $region52: #{tpu_custom_call.1} parent=1 // pred_region
      %s2173 = ssub.s32 256, 256
      %2174 = vsyncadd [#allocation4], %s2173
      %s2175 = sshll.u32 [#allocation11], 4
      %s2176 = int_to_ptr.vmem [resolvable:$true] %s2175
      %2181 = dma.vmem_to_hbm [thread:$0]  %s2176, 256, %s7, [#allocation4], 128, 128, 8
    $region53: #{tpu_custom_call.1} parent=1 // pred_fallthru
      _
    // Predicated region
    $region54: #{tpu_custom_call.1} parent=1 // pred_check
      _
    $region55: #{tpu_custom_call.1} parent=1 // pred_check_branch
      %2183 = sbr.rel (0) target = $region57
    $region56: #{tpu_custom_call.1} parent=1 // pred_region
      %2184 = dma.done [#allocation4], 256
    $region57: #{tpu_custom_call.1} parent=1 // pred_fallthru
      _
    %2185 = vsyncpa [#allocation3], 1
    %2186 = vsyncpa [#allocation6], 1
    %2187 = vsyncpa [#allocation9], 1
    %2188 = vsyncpa [#allocation4], 1

</llo_original>
